<compile_context>
chip_gen: v7x
topology: tpu7x:2x2x1
jax: 0.10.0
libtpu: 0.0.40
codegen_flags: <defaults>
</compile_context>

<pallas_src>
import functools

import jax
import jax.numpy as jnp
import numpy as np
from jax.experimental import pallas as pl
from jax.experimental.pallas import tpu as pltpu


# ---------------------------------------------------------------------------
# Small helpers
# ---------------------------------------------------------------------------
def _round_up(n, m):
    return ((n + m - 1) // m) * m


# PyTorch gate order is (i, f, g, o).  We pack as (i, f, o, g) so the three
# sigmoid gates are contiguous -> one sigmoid over [:, :3H], one tanh over the
# last H columns.
_GATE_PERM = (0, 1, 3, 2)


def _pack_gate_matrix(w, gpad):
    """w: (in, 4H) PyTorch order -> (in, gpad), gates reordered i,f,o,g."""
    in_size, four_h = w.shape
    h = four_h // 4
    out = jnp.zeros((in_size, gpad), jnp.float32)
    for dst, src in enumerate(_GATE_PERM):
        out = out.at[:, dst * h:(dst + 1) * h].set(w[:, src * h:(src + 1) * h])
    return out


def _pack_gate_bias(b, gpad):
    """b: (4H,) PyTorch order -> (1, gpad), gates reordered i,f,o,g."""
    four_h = b.shape[-1]
    h = four_h // 4
    out = jnp.zeros((1, gpad), jnp.float32)
    for dst, src in enumerate(_GATE_PERM):
        out = out.at[0, dst * h:(dst + 1) * h].set(b[src * h:(src + 1) * h])
    return out


# ---------------------------------------------------------------------------
# Fused Pallas kernel: all LSTM layers + final Linear in one kernel
# ---------------------------------------------------------------------------
def _fused_lstm_kernel(x_ref, w_ih0_ref, w_ih_rest_ref, w_hh_ref, b_ref,
                       w_fc_ref, b_fc_ref, out_ref,
                       h_scr, c_scr, act_a, act_b,
                       *, tc, bpad, hsz, num_layers, seq_len, padded_len):
    """One grid step = one time chunk of tc steps, through ALL layers.

    x_ref       : (tc*bpad, F)       time-major, batch-padded input chunk
    w_ih0_ref   : (F, G)             layer-0 input weights (gate packed)
    w_ih_rest   : (max(L-1,1), H, G) layer>=1 input weights
    w_hh_ref    : (L, H, G)          recurrent weights
    b_ref       : (L, 1, G)          b_ih + b_hh per layer (f32)
    w_fc_ref    : (H, O), b_fc_ref: (1, O)
    out_ref     : (bpad, O)          written only on the last chunk
    h_scr/c_scr : (L, bpad, H)       per-layer carries (persist across chunks)
    act_a/act_b : (tc*bpad, H)       inter-layer activation ping-pong buffers
    """
    chunk = pl.program_id(0)
    wdt = w_hh_ref.dtype                       # f32 or bf16 (matmul-only)
    mask_tail = padded_len != seq_len          # static python bool
    H = hsz
    act_bufs = (act_a, act_b)

    @pl.when(chunk == 0)
    def _():
        h_scr[...] = jnp.zeros_like(h_scr)
        c_scr[...] = jnp.zeros_like(c_scr)

    h = None
    for l in range(num_layers):
        # --- hoisted input projection for the whole chunk: one big MXU matmul
        if l == 0:
            x_in = x_ref[...]                              # (tc*bpad, F)
            w_in = w_ih0_ref[...]                          # (F, G)
        else:
            x_in = act_bufs[(l - 1) % 2][...]              # (tc*bpad, H)
            w_in = w_ih_rest_ref[l - 1]                    # (H, G)
        xg = jnp.dot(x_in.astype(wdt), w_in,
                     preferred_element_type=jnp.float32) + b_ref[l]

        w_hh = w_hh_ref[l]                                 # (H, G)
        h = h_scr[l]                                       # (bpad, H) f32
        c = c_scr[l]
        out_buf = act_bufs[l % 2] if l < num_layers - 1 else None

        # Serial recurrence over the chunk (static unroll, tc is small).
        for t in range(tc):
            g_row = xg[t * bpad:(t + 1) * bpad, :] + jnp.dot(
                h.astype(wdt), w_hh, preferred_element_type=jnp.float32)
            # gates packed as [i, f, o | g]: one sigmoid pass + one tanh
            sig = jax.nn.sigmoid(g_row[:, :3 * H])
            i_g = sig[:, 0 * H:1 * H]
            f_g = sig[:, 1 * H:2 * H]
            o_g = sig[:, 2 * H:3 * H]
            g_g = jnp.tanh(g_row[:, 3 * H:4 * H])
            c_new = f_g * c + i_g * g_g
            h_new = o_g * jnp.tanh(c_new)
            if mask_tail:
                # Padded (zero-input) timesteps must not update the state:
                # the bias alone would otherwise corrupt h/c.
                valid = (chunk * tc + t) < seq_len
                c = jnp.where(valid, c_new, c)
                h = jnp.where(valid, h_new, h)
            else:
                c, h = c_new, h_new
            if out_buf is not None:
                out_buf[t * bpad:(t + 1) * bpad, :] = h

        h_scr[l] = h
        c_scr[l] = c

    h_last = h  # last layer's hidden state after this chunk

    # Fused final Linear, only the last timestep's hidden state is needed.
    @pl.when(chunk == pl.num_programs(0) - 1)
    def _():
        out_ref[...] = jnp.dot(
            h_last.astype(w_fc_ref.dtype), w_fc_ref[...],
            preferred_element_type=jnp.float32) + b_fc_ref[...]


# ---------------------------------------------------------------------------
# Wrapper
# ---------------------------------------------------------------------------
def lstm_model_forward(x_btf, params, *, max_time_chunk=16):
    """Full module forward. x_btf: (B, T, F) batch-first like PyTorch."""
    x = jnp.asarray(x_btf, jnp.float32)
    b_sz, t_len, f_sz = x.shape
    H = params["hidden_size"]
    O = params["output_size"]
    L = params["num_layers"]
    gpad = params["gpad"]

    bpad = _round_up(max(b_sz, 1), 8)                   # sublane multiple (f32)
    tc = _round_up(min(t_len, max_time_chunk), 8)       # chunk len, 8-aligned
    t_pad = _round_up(t_len, tc)                        # cdiv-style padding
    n_chunks = t_pad // tc

    # batch-first -> time-major; pad batch (sublanes) and, only if needed,
    # time (tail chunk).  Feature dim is left UNPADDED (block last dim may
    # equal the full array dim), so no 32x input-DMA inflation.
    x_tbf = jnp.transpose(x, (1, 0, 2))                 # (T, B, F)
    if (t_pad, bpad) != (t_len, b_sz):
        x_tbf = jnp.zeros((t_pad, bpad, f_sz), jnp.float32
                          ).at[:t_len, :b_sz, :].set(x_tbf)
    x_flat = x_tbf.reshape(t_pad * bpad, f_sz)          # (T_pad*bpad, F)

    w_ih0, w_ih_rest = params["w_ih0"], params["w_ih_rest"]
    w_hh, b_all = params["w_hh"], params["b"]
    w_fc, b_fc = params["w_fc"], params["b_fc"]

    # Explicit VMEM budget: weights + double-buffered x chunk + out + scratch.
    def _nbytes(a):
        return int(a.size) * a.dtype.itemsize
    weight_bytes = sum(_nbytes(a) for a in (w_ih0, w_ih_rest, w_hh, b_all, w_fc, b_fc))
    chunk_bytes = tc * bpad * f_sz * 4
    scratch_bytes = (2 * L * bpad * H + 2 * tc * bpad * H) * 4
    budget = 2 * (weight_bytes + chunk_bytes + bpad * O * 4) + scratch_bytes
    vmem_limit = int(min(120 * 2**20, max(32 * 2**20, 2 * budget)))

    kernel = functools.partial(
        _fused_lstm_kernel, tc=tc, bpad=bpad, hsz=H, num_layers=L,
        seq_len=t_len, padded_len=t_pad)

    out_p = pl.pallas_call(
        kernel,
        out_shape=jax.ShapeDtypeStruct((bpad, O), jnp.float32),
        grid_spec=pltpu.PrefetchScalarGridSpec(
            num_scalar_prefetch=0,
            grid=(n_chunks,),
            in_specs=[
                pl.BlockSpec((tc * bpad, f_sz), lambda c: (c, 0)),
                pl.BlockSpec(w_ih0.shape, lambda c: (0, 0)),
                pl.BlockSpec(w_ih_rest.shape, lambda c: (0, 0, 0)),
                pl.BlockSpec(w_hh.shape, lambda c: (0, 0, 0)),
                pl.BlockSpec(b_all.shape, lambda c: (0, 0, 0)),
                pl.BlockSpec(w_fc.shape, lambda c: (0, 0)),
                pl.BlockSpec(b_fc.shape, lambda c: (0, 0)),
            ],
            out_specs=pl.BlockSpec((bpad, O), lambda c: (0, 0)),
            scratch_shapes=[
                pltpu.VMEM((L, bpad, H), jnp.float32),      # h carry / layer
                pltpu.VMEM((L, bpad, H), jnp.float32),      # c carry / layer
                pltpu.VMEM((tc * bpad, H), jnp.float32),    # inter-layer act A
                pltpu.VMEM((tc * bpad, H), jnp.float32),    # inter-layer act B
            ],
        ),
        compiler_params=pltpu.CompilerParams(
            dimension_semantics=("arbitrary",),   # time recurrence: sequential
            vmem_limit_bytes=vmem_limit,
        ),
    )(x_flat, w_ih0, w_ih_rest, w_hh, b_all, w_fc, b_fc)

    return out_p[:b_sz, :]


# ---------------------------------------------------------------------------
# Deterministic parameter init (shapes match nn.LSTM / nn.Linear)
# ---------------------------------------------------------------------------
def init_params(key, feature_size, hidden_size, num_layers, output_size):
    bound = 1.0 / np.sqrt(hidden_size)
    H = hidden_size
    gpad = _round_up(4 * H, 128)        # total gate width, lane aligned
    # bf16 weights at large H (matmul-only; valid on v5e too — its MXU is
    # bf16-native, only elementwise gate math must stay f32).
    wdt = jnp.bfloat16 if H >= 256 else jnp.float32

    raw_layers = []
    w_ih_list, w_hh_list, b_list = [], [], []
    for layer in range(num_layers):
        in_size = feature_size if layer == 0 else H
        key, k1, k2, k3, k4 = jax.random.split(key, 5)
        # Stored transposed vs. PyTorch: (in, 4H) / (H, 4H); gate order i,f,g,o.
        w_ih = jax.random.uniform(k1, (in_size, 4 * H), jnp.float32, -bound, bound)
        w_hh = jax.random.uniform(k2, (H, 4 * H), jnp.float32, -bound, bound)
        b_ih = jax.random.uniform(k3, (4 * H,), jnp.float32, -bound, bound)
        b_hh = jax.random.uniform(k4, (4 * H,), jnp.float32, -bound, bound)
        b = b_ih + b_hh
        raw_layers.append((w_ih, w_hh, b))
        w_ih_list.append(_pack_gate_matrix(w_ih, gpad).astype(wdt))
        w_hh_list.append(_pack_gate_matrix(w_hh, gpad).astype(wdt))
        b_list.append(_pack_gate_bias(b, gpad))      # biases stay f32

    w_ih0 = w_ih_list[0]                                       # (F, gpad)
    if num_layers > 1:
        w_ih_rest = jnp.stack(w_ih_list[1:], axis=0)           # (L-1, H, gpad)
    else:
        w_ih_rest = jnp.zeros((1, H, gpad), wdt)               # unused dummy
    w_hh_all = jnp.stack(w_hh_list, axis=0)                    # (L, H, gpad)
    b_all = jnp.stack(b_list, axis=0)                          # (L, 1, gpad)

    key, k5, k6 = jax.random.split(key, 3)
    w_fc = jax.random.uniform(k5, (H, output_size), jnp.float32, -bound, bound)
    b_fc = jax.random.uniform(k6, (output_size,), jnp.float32, -bound, bound)

    return {
        "w_ih0": w_ih0, "w_ih_rest": w_ih_rest, "w_hh": w_hh_all, "b": b_all,
        "w_fc": w_fc, "b_fc": b_fc.reshape(1, -1),
        "layers_raw": raw_layers, "w_fc_raw": w_fc, "b_fc_raw": b_fc,
        "hidden_size": H, "feature_size": feature_size,
        "output_size": output_size, "num_layers": num_layers, "gpad": gpad,
    }


# ---------------------------------------------------------------------------
# Pure-numpy reference (same semantics as torch forward) for sanity checking
# ---------------------------------------------------------------------------
def reference_forward(x_btf, params):
    x = np.asarray(x_btf, dtype=np.float32)
    b_sz = x.shape[0]
    seq = np.transpose(x, (1, 0, 2))  # (T, B, F)
    for (w_ih, w_hh, b) in params["layers_raw"]:
        w_ih = np.asarray(w_ih); w_hh = np.asarray(w_hh)
        b = np.asarray(b).reshape(1, -1)
        hsz = w_hh.shape[0]
        h = np.zeros((b_sz, hsz), np.float32)
        c = np.zeros((b_sz, hsz), np.float32)
        outs = []
        for t in range(seq.shape[0]):
            gates = seq[t] @ w_ih + h @ w_hh + b
            i = 1.0 / (1.0 + np.exp(-gates[:, 0 * hsz:1 * hsz]))
            f = 1.0 / (1.0 + np.exp(-gates[:, 1 * hsz:2 * hsz]))
            g = np.tanh(gates[:, 2 * hsz:3 * hsz])
            o = 1.0 / (1.0 + np.exp(-gates[:, 3 * hsz:4 * hsz]))
            c = f * c + i * g
            h = o * np.tanh(c)
            outs.append(h)
        seq = np.stack(outs, axis=0)
    return seq[-1] @ np.asarray(params["w_fc_raw"]) + np.asarray(params["b_fc_raw"]).reshape(1, -1)


# ---------------------------------------------------------------------------
if __name__ == "__main__":
    # Small shapes consistent with the module's forward.
    batch, seq_len = 2, 8
    feature_size, hidden_size, num_layers, output_size = 4, 32, 2, 3

    key = jax.random.PRNGKey(0)
    kx, kp = jax.random.split(key)
    x = jax.random.normal(kx, (batch, seq_len, feature_size), jnp.float32)
    params = init_params(kp, feature_size, hidden_size, num_layers, output_size)

    out = jax.block_until_ready(lstm_model_forward(x, params))
    assert out.shape == (batch, output_size), out.shape

    ref = reference_forward(x, params)
    np.testing.assert_allclose(np.asarray(out), ref, rtol=5e-2, atol=5e-2)

    print("KERNEL_OK")
</pallas_src>

<mosaic_0001>
module attributes {stable_mosaic.version = 11 : i64} {
  func.func @_fused_lstm_kernel(%arg0: i32, %arg1: memref<64x4xf32, #tpu.memory_space<vmem>>, %arg2: memref<4x128xf32, #tpu.memory_space<vmem>>, %arg3: memref<1x32x128xf32, #tpu.memory_space<vmem>>, %arg4: memref<2x32x128xf32, #tpu.memory_space<vmem>>, %arg5: memref<2x1x128xf32, #tpu.memory_space<vmem>>, %arg6: memref<32x3xf32, #tpu.memory_space<vmem>>, %arg7: memref<1x3xf32, #tpu.memory_space<vmem>>, %arg8: memref<8x3xf32, #tpu.memory_space<vmem>>, %arg9: memref<2x8x32xf32, #tpu.memory_space<vmem>>, %arg10: memref<2x8x32xf32, #tpu.memory_space<vmem>>, %arg11: memref<64x32xf32, #tpu.memory_space<vmem>>, %arg12: memref<64x32xf32, #tpu.memory_space<vmem>>) attributes {dimension_semantics = [#tpu.dimension_semantics<arbitrary>], iteration_bounds = array<i64: 1>, scalar_prefetch = 0 : i64, scratch_operands = 4 : i64, tpu.core_type = #tpu.core_type<tc>, window_params = [{transform_indices = @transform_0, window_bounds = array<i64: 64, 4>}, {pipeline_mode = #tpu.pipeline_mode<synchronous>, transform_indices = @transform_1, window_bounds = array<i64: 4, 128>}, {pipeline_mode = #tpu.pipeline_mode<synchronous>, transform_indices = @transform_2, window_bounds = array<i64: 1, 32, 128>}, {pipeline_mode = #tpu.pipeline_mode<synchronous>, transform_indices = @transform_3, window_bounds = array<i64: 2, 32, 128>}, {pipeline_mode = #tpu.pipeline_mode<synchronous>, transform_indices = @transform_4, window_bounds = array<i64: 2, 1, 128>}, {pipeline_mode = #tpu.pipeline_mode<synchronous>, transform_indices = @transform_5, window_bounds = array<i64: 32, 3>}, {pipeline_mode = #tpu.pipeline_mode<synchronous>, transform_indices = @transform_6, window_bounds = array<i64: 1, 3>}, {pipeline_mode = #tpu.pipeline_mode<synchronous>, transform_indices = @transform_7, window_bounds = array<i64: 8, 3>}]} {
    %c0_i32 = arith.constant 0 : i32
    %0 = arith.cmpi eq, %arg0, %c0_i32 : i32
    %1 = arith.extui %0 : i1 to i32
    %c0_i32_0 = arith.constant 0 : i32
    %2 = arith.cmpi ne, %1, %c0_i32_0 : i32
    scf.if %2 {
      %cst_88 = arith.constant 0.000000e+00 : f32
      %357 = vector.broadcast %cst_88 : f32 to vector<2x8x32xf32>
      %c0_89 = arith.constant 0 : index
      %c0_90 = arith.constant 0 : index
      %c0_91 = arith.constant 0 : index
      %358 = vector.load %arg9[%c0_89, %c0_90, %c0_91] : memref<2x8x32xf32, #tpu.memory_space<vmem>>, vector<2x8x32xf32>
      tpu.vector_store %arg9[%c0_89, %c0_90, %c0_91], %357 {strides = array<i32>} : memref<2x8x32xf32, #tpu.memory_space<vmem>>, vector<2x8x32xf32>,
      %cst_92 = arith.constant 0.000000e+00 : f32
      %359 = vector.broadcast %cst_92 : f32 to vector<2x8x32xf32>
      %c0_93 = arith.constant 0 : index
      %c0_94 = arith.constant 0 : index
      %c0_95 = arith.constant 0 : index
      %360 = vector.load %arg10[%c0_93, %c0_94, %c0_95] : memref<2x8x32xf32, #tpu.memory_space<vmem>>, vector<2x8x32xf32>
      tpu.vector_store %arg10[%c0_93, %c0_94, %c0_95], %359 {strides = array<i32>} : memref<2x8x32xf32, #tpu.memory_space<vmem>>, vector<2x8x32xf32>,
    } else {
    }
    %c0 = arith.constant 0 : index
    %c0_1 = arith.constant 0 : index
    %3 = vector.load %arg1[%c0, %c0_1] : memref<64x4xf32, #tpu.memory_space<vmem>>, vector<64x4xf32>
    %c0_2 = arith.constant 0 : index
    %c0_3 = arith.constant 0 : index
    %4 = vector.load %arg2[%c0_2, %c0_3] : memref<4x128xf32, #tpu.memory_space<vmem>>, vector<4x128xf32>
    %cst = arith.constant dense<0.000000e+00> : vector<64x128xf32>
    %5 = tpu.matmul %3, %4, %cst {dimension_numbers = #tpu.dot_dimension_numbers<[1], [0], [0], [1], [0, 0, 1, 1], [], []>} : vector<64x4xf32>, vector<4x128xf32>, vector<64x128xf32> -> vector<64x128xf32>
    %c0_4 = arith.constant 0 : index
    %c0_5 = arith.constant 0 : index
    %c0_6 = arith.constant 0 : index
    %6 = vector.load %arg5[%c0_4, %c0_5, %c0_6] : memref<2x1x128xf32, #tpu.memory_space<vmem>>, vector<1x1x128xf32>
    %7 = vector.shape_cast %6 : vector<1x1x128xf32> to vector<1x128xf32>
    %8 = vector.broadcast %7 : vector<1x128xf32> to vector<64x128xf32>
    %9 = arith.addf %5, %8 : vector<64x128xf32>
    %c0_7 = arith.constant 0 : index
    %c0_8 = arith.constant 0 : index
    %c0_9 = arith.constant 0 : index
    %10 = vector.load %arg4[%c0_7, %c0_8, %c0_9] : memref<2x32x128xf32, #tpu.memory_space<vmem>>, vector<1x32x128xf32>
    %11 = vector.shape_cast %10 : vector<1x32x128xf32> to vector<32x128xf32>
    %c0_10 = arith.constant 0 : index
    %c0_11 = arith.constant 0 : index
    %c0_12 = arith.constant 0 : index
    %12 = vector.load %arg9[%c0_10, %c0_11, %c0_12] : memref<2x8x32xf32, #tpu.memory_space<vmem>>, vector<1x8x32xf32>
    %13 = vector.shape_cast %12 : vector<1x8x32xf32> to vector<8x32xf32>
    %c0_13 = arith.constant 0 : index
    %c0_14 = arith.constant 0 : index
    %c0_15 = arith.constant 0 : index
    %14 = vector.load %arg10[%c0_13, %c0_14, %c0_15] : memref<2x8x32xf32, #tpu.memory_space<vmem>>, vector<1x8x32xf32>
    %15 = vector.shape_cast %14 : vector<1x8x32xf32> to vector<8x32xf32>
    %16 = vector.extract_strided_slice %9 {offsets = [0, 0], sizes = [8, 128], strides = [1, 1]} : vector<64x128xf32> to vector<8x128xf32>
    %cst_16 = arith.constant dense<0.000000e+00> : vector<8x128xf32>
    %17 = tpu.matmul %13, %11, %cst_16 {dimension_numbers = #tpu.dot_dimension_numbers<[1], [0], [0], [1], [0, 0, 1, 1], [], []>} : vector<8x32xf32>, vector<32x128xf32>, vector<8x128xf32> -> vector<8x128xf32>
    %18 = arith.addf %16, %17 : vector<8x128xf32>
    %19 = vector.extract_strided_slice %18 {offsets = [0, 0], sizes = [8, 96], strides = [1, 1]} : vector<8x128xf32> to vector<8x96xf32>
    %20 = arith.negf %19 : vector<8x96xf32>
    %21 = math.exp %20 : vector<8x96xf32>
    %cst_17 = arith.constant 1.000000e+00 : f32
    %22 = vector.broadcast %cst_17 : f32 to vector<8x96xf32>
    %23 = arith.addf %22, %21 : vector<8x96xf32>
    %24 = arith.divf %22, %23 : vector<8x96xf32>
    %25 = vector.extract_strided_slice %24 {offsets = [0, 0], sizes = [8, 32], strides = [1, 1]} : vector<8x96xf32> to vector<8x32xf32>
    %26 = vector.extract_strided_slice %24 {offsets = [0, 32], sizes = [8, 32], strides = [1, 1]} : vector<8x96xf32> to vector<8x32xf32>
    %27 = vector.extract_strided_slice %24 {offsets = [0, 64], sizes = [8, 32], strides = [1, 1]} : vector<8x96xf32> to vector<8x32xf32>
    %28 = vector.extract_strided_slice %18 {offsets = [0, 96], sizes = [8, 32], strides = [1, 1]} : vector<8x128xf32> to vector<8x32xf32>
    %29 = math.tanh %28 : vector<8x32xf32>
    %30 = arith.mulf %26, %15 : vector<8x32xf32>
    %31 = arith.mulf %25, %29 : vector<8x32xf32>
    %32 = arith.addf %30, %31 : vector<8x32xf32>
    %33 = math.tanh %32 : vector<8x32xf32>
    %34 = arith.mulf %27, %33 : vector<8x32xf32>
    %c0_18 = arith.constant 0 : index
    %c0_19 = arith.constant 0 : index
    %35 = vector.load %arg11[%c0_18, %c0_19] : memref<64x32xf32, #tpu.memory_space<vmem>>, vector<8x32xf32>
    tpu.vector_store %arg11[%c0_18, %c0_19], %34 {strides = array<i32>} : memref<64x32xf32, #tpu.memory_space<vmem>>, vector<8x32xf32>,
    %36 = vector.extract_strided_slice %9 {offsets = [8, 0], sizes = [8, 128], strides = [1, 1]} : vector<64x128xf32> to vector<8x128xf32>
    %cst_20 = arith.constant dense<0.000000e+00> : vector<8x128xf32>
    %37 = tpu.matmul %34, %11, %cst_20 {dimension_numbers = #tpu.dot_dimension_numbers<[1], [0], [0], [1], [0, 0, 1, 1], [], []>} : vector<8x32xf32>, vector<32x128xf32>, vector<8x128xf32> -> vector<8x128xf32>
    %38 = arith.addf %36, %37 : vector<8x128xf32>
    %39 = vector.extract_strided_slice %38 {offsets = [0, 0], sizes = [8, 96], strides = [1, 1]} : vector<8x128xf32> to vector<8x96xf32>
    %40 = arith.negf %39 : vector<8x96xf32>
    %41 = math.exp %40 : vector<8x96xf32>
    %cst_21 = arith.constant 1.000000e+00 : f32
    %42 = vector.broadcast %cst_21 : f32 to vector<8x96xf32>
    %43 = arith.addf %42, %41 : vector<8x96xf32>
    %44 = arith.divf %42, %43 : vector<8x96xf32>
    %45 = vector.extract_strided_slice %44 {offsets = [0, 0], sizes = [8, 32], strides = [1, 1]} : vector<8x96xf32> to vector<8x32xf32>
    %46 = vector.extract_strided_slice %44 {offsets = [0, 32], sizes = [8, 32], strides = [1, 1]} : vector<8x96xf32> to vector<8x32xf32>
    %47 = vector.extract_strided_slice %44 {offsets = [0, 64], sizes = [8, 32], strides = [1, 1]} : vector<8x96xf32> to vector<8x32xf32>
    %48 = vector.extract_strided_slice %38 {offsets = [0, 96], sizes = [8, 32], strides = [1, 1]} : vector<8x128xf32> to vector<8x32xf32>
    %49 = math.tanh %48 : vector<8x32xf32>
    %50 = arith.mulf %46, %32 : vector<8x32xf32>
    %51 = arith.mulf %45, %49 : vector<8x32xf32>
    %52 = arith.addf %50, %51 : vector<8x32xf32>
    %53 = math.tanh %52 : vector<8x32xf32>
    %54 = arith.mulf %47, %53 : vector<8x32xf32>
    %c8 = arith.constant 8 : index
    %c0_22 = arith.constant 0 : index
    %55 = vector.load %arg11[%c8, %c0_22] : memref<64x32xf32, #tpu.memory_space<vmem>>, vector<8x32xf32>
    tpu.vector_store %arg11[%c8, %c0_22], %54 {strides = array<i32>} : memref<64x32xf32, #tpu.memory_space<vmem>>, vector<8x32xf32>,
    %56 = vector.extract_strided_slice %9 {offsets = [16, 0], sizes = [8, 128], strides = [1, 1]} : vector<64x128xf32> to vector<8x128xf32>
    %cst_23 = arith.constant dense<0.000000e+00> : vector<8x128xf32>
    %57 = tpu.matmul %54, %11, %cst_23 {dimension_numbers = #tpu.dot_dimension_numbers<[1], [0], [0], [1], [0, 0, 1, 1], [], []>} : vector<8x32xf32>, vector<32x128xf32>, vector<8x128xf32> -> vector<8x128xf32>
    %58 = arith.addf %56, %57 : vector<8x128xf32>
    %59 = vector.extract_strided_slice %58 {offsets = [0, 0], sizes = [8, 96], strides = [1, 1]} : vector<8x128xf32> to vector<8x96xf32>
    %60 = arith.negf %59 : vector<8x96xf32>
    %61 = math.exp %60 : vector<8x96xf32>
    %cst_24 = arith.constant 1.000000e+00 : f32
    %62 = vector.broadcast %cst_24 : f32 to vector<8x96xf32>
    %63 = arith.addf %62, %61 : vector<8x96xf32>
    %64 = arith.divf %62, %63 : vector<8x96xf32>
    %65 = vector.extract_strided_slice %64 {offsets = [0, 0], sizes = [8, 32], strides = [1, 1]} : vector<8x96xf32> to vector<8x32xf32>
    %66 = vector.extract_strided_slice %64 {offsets = [0, 32], sizes = [8, 32], strides = [1, 1]} : vector<8x96xf32> to vector<8x32xf32>
    %67 = vector.extract_strided_slice %64 {offsets = [0, 64], sizes = [8, 32], strides = [1, 1]} : vector<8x96xf32> to vector<8x32xf32>
    %68 = vector.extract_strided_slice %58 {offsets = [0, 96], sizes = [8, 32], strides = [1, 1]} : vector<8x128xf32> to vector<8x32xf32>
    %69 = math.tanh %68 : vector<8x32xf32>
    %70 = arith.mulf %66, %52 : vector<8x32xf32>
    %71 = arith.mulf %65, %69 : vector<8x32xf32>
    %72 = arith.addf %70, %71 : vector<8x32xf32>
    %73 = math.tanh %72 : vector<8x32xf32>
    %74 = arith.mulf %67, %73 : vector<8x32xf32>
    %c16 = arith.constant 16 : index
    %c0_25 = arith.constant 0 : index
    %75 = vector.load %arg11[%c16, %c0_25] : memref<64x32xf32, #tpu.memory_space<vmem>>, vector<8x32xf32>
    tpu.vector_store %arg11[%c16, %c0_25], %74 {strides = array<i32>} : memref<64x32xf32, #tpu.memory_space<vmem>>, vector<8x32xf32>,
    %76 = vector.extract_strided_slice %9 {offsets = [24, 0], sizes = [8, 128], strides = [1, 1]} : vector<64x128xf32> to vector<8x128xf32>
    %cst_26 = arith.constant dense<0.000000e+00> : vector<8x128xf32>
    %77 = tpu.matmul %74, %11, %cst_26 {dimension_numbers = #tpu.dot_dimension_numbers<[1], [0], [0], [1], [0, 0, 1, 1], [], []>} : vector<8x32xf32>, vector<32x128xf32>, vector<8x128xf32> -> vector<8x128xf32>
    %78 = arith.addf %76, %77 : vector<8x128xf32>
    %79 = vector.extract_strided_slice %78 {offsets = [0, 0], sizes = [8, 96], strides = [1, 1]} : vector<8x128xf32> to vector<8x96xf32>
    %80 = arith.negf %79 : vector<8x96xf32>
    %81 = math.exp %80 : vector<8x96xf32>
    %cst_27 = arith.constant 1.000000e+00 : f32
    %82 = vector.broadcast %cst_27 : f32 to vector<8x96xf32>
    %83 = arith.addf %82, %81 : vector<8x96xf32>
    %84 = arith.divf %82, %83 : vector<8x96xf32>
    %85 = vector.extract_strided_slice %84 {offsets = [0, 0], sizes = [8, 32], strides = [1, 1]} : vector<8x96xf32> to vector<8x32xf32>
    %86 = vector.extract_strided_slice %84 {offsets = [0, 32], sizes = [8, 32], strides = [1, 1]} : vector<8x96xf32> to vector<8x32xf32>
    %87 = vector.extract_strided_slice %84 {offsets = [0, 64], sizes = [8, 32], strides = [1, 1]} : vector<8x96xf32> to vector<8x32xf32>
    %88 = vector.extract_strided_slice %78 {offsets = [0, 96], sizes = [8, 32], strides = [1, 1]} : vector<8x128xf32> to vector<8x32xf32>
    %89 = math.tanh %88 : vector<8x32xf32>
    %90 = arith.mulf %86, %72 : vector<8x32xf32>
    %91 = arith.mulf %85, %89 : vector<8x32xf32>
    %92 = arith.addf %90, %91 : vector<8x32xf32>
    %93 = math.tanh %92 : vector<8x32xf32>
    %94 = arith.mulf %87, %93 : vector<8x32xf32>
    %c24 = arith.constant 24 : index
    %c0_28 = arith.constant 0 : index
    %95 = vector.load %arg11[%c24, %c0_28] : memref<64x32xf32, #tpu.memory_space<vmem>>, vector<8x32xf32>
    tpu.vector_store %arg11[%c24, %c0_28], %94 {strides = array<i32>} : memref<64x32xf32, #tpu.memory_space<vmem>>, vector<8x32xf32>,
    %96 = vector.extract_strided_slice %9 {offsets = [32, 0], sizes = [8, 128], strides = [1, 1]} : vector<64x128xf32> to vector<8x128xf32>
    %cst_29 = arith.constant dense<0.000000e+00> : vector<8x128xf32>
    %97 = tpu.matmul %94, %11, %cst_29 {dimension_numbers = #tpu.dot_dimension_numbers<[1], [0], [0], [1], [0, 0, 1, 1], [], []>} : vector<8x32xf32>, vector<32x128xf32>, vector<8x128xf32> -> vector<8x128xf32>
    %98 = arith.addf %96, %97 : vector<8x128xf32>
    %99 = vector.extract_strided_slice %98 {offsets = [0, 0], sizes = [8, 96], strides = [1, 1]} : vector<8x128xf32> to vector<8x96xf32>
    %100 = arith.negf %99 : vector<8x96xf32>
    %101 = math.exp %100 : vector<8x96xf32>
    %cst_30 = arith.constant 1.000000e+00 : f32
    %102 = vector.broadcast %cst_30 : f32 to vector<8x96xf32>
    %103 = arith.addf %102, %101 : vector<8x96xf32>
    %104 = arith.divf %102, %103 : vector<8x96xf32>
    %105 = vector.extract_strided_slice %104 {offsets = [0, 0], sizes = [8, 32], strides = [1, 1]} : vector<8x96xf32> to vector<8x32xf32>
    %106 = vector.extract_strided_slice %104 {offsets = [0, 32], sizes = [8, 32], strides = [1, 1]} : vector<8x96xf32> to vector<8x32xf32>
    %107 = vector.extract_strided_slice %104 {offsets = [0, 64], sizes = [8, 32], strides = [1, 1]} : vector<8x96xf32> to vector<8x32xf32>
    %108 = vector.extract_strided_slice %98 {offsets = [0, 96], sizes = [8, 32], strides = [1, 1]} : vector<8x128xf32> to vector<8x32xf32>
    %109 = math.tanh %108 : vector<8x32xf32>
    %110 = arith.mulf %106, %92 : vector<8x32xf32>
    %111 = arith.mulf %105, %109 : vector<8x32xf32>
    %112 = arith.addf %110, %111 : vector<8x32xf32>
    %113 = math.tanh %112 : vector<8x32xf32>
    %114 = arith.mulf %107, %113 : vector<8x32xf32>
    %c32 = arith.constant 32 : index
    %c0_31 = arith.constant 0 : index
    %115 = vector.load %arg11[%c32, %c0_31] : memref<64x32xf32, #tpu.memory_space<vmem>>, vector<8x32xf32>
    tpu.vector_store %arg11[%c32, %c0_31], %114 {strides = array<i32>} : memref<64x32xf32, #tpu.memory_space<vmem>>, vector<8x32xf32>,
    %116 = vector.extract_strided_slice %9 {offsets = [40, 0], sizes = [8, 128], strides = [1, 1]} : vector<64x128xf32> to vector<8x128xf32>
    %cst_32 = arith.constant dense<0.000000e+00> : vector<8x128xf32>
    %117 = tpu.matmul %114, %11, %cst_32 {dimension_numbers = #tpu.dot_dimension_numbers<[1], [0], [0], [1], [0, 0, 1, 1], [], []>} : vector<8x32xf32>, vector<32x128xf32>, vector<8x128xf32> -> vector<8x128xf32>
    %118 = arith.addf %116, %117 : vector<8x128xf32>
    %119 = vector.extract_strided_slice %118 {offsets = [0, 0], sizes = [8, 96], strides = [1, 1]} : vector<8x128xf32> to vector<8x96xf32>
    %120 = arith.negf %119 : vector<8x96xf32>
    %121 = math.exp %120 : vector<8x96xf32>
    %cst_33 = arith.constant 1.000000e+00 : f32
    %122 = vector.broadcast %cst_33 : f32 to vector<8x96xf32>
    %123 = arith.addf %122, %121 : vector<8x96xf32>
    %124 = arith.divf %122, %123 : vector<8x96xf32>
    %125 = vector.extract_strided_slice %124 {offsets = [0, 0], sizes = [8, 32], strides = [1, 1]} : vector<8x96xf32> to vector<8x32xf32>
    %126 = vector.extract_strided_slice %124 {offsets = [0, 32], sizes = [8, 32], strides = [1, 1]} : vector<8x96xf32> to vector<8x32xf32>
    %127 = vector.extract_strided_slice %124 {offsets = [0, 64], sizes = [8, 32], strides = [1, 1]} : vector<8x96xf32> to vector<8x32xf32>
    %128 = vector.extract_strided_slice %118 {offsets = [0, 96], sizes = [8, 32], strides = [1, 1]} : vector<8x128xf32> to vector<8x32xf32>
    %129 = math.tanh %128 : vector<8x32xf32>
    %130 = arith.mulf %126, %112 : vector<8x32xf32>
    %131 = arith.mulf %125, %129 : vector<8x32xf32>
    %132 = arith.addf %130, %131 : vector<8x32xf32>
    %133 = math.tanh %132 : vector<8x32xf32>
    %134 = arith.mulf %127, %133 : vector<8x32xf32>
    %c40 = arith.constant 40 : index
    %c0_34 = arith.constant 0 : index
    %135 = vector.load %arg11[%c40, %c0_34] : memref<64x32xf32, #tpu.memory_space<vmem>>, vector<8x32xf32>
    tpu.vector_store %arg11[%c40, %c0_34], %134 {strides = array<i32>} : memref<64x32xf32, #tpu.memory_space<vmem>>, vector<8x32xf32>,
    %136 = vector.extract_strided_slice %9 {offsets = [48, 0], sizes = [8, 128], strides = [1, 1]} : vector<64x128xf32> to vector<8x128xf32>
    %cst_35 = arith.constant dense<0.000000e+00> : vector<8x128xf32>
    %137 = tpu.matmul %134, %11, %cst_35 {dimension_numbers = #tpu.dot_dimension_numbers<[1], [0], [0], [1], [0, 0, 1, 1], [], []>} : vector<8x32xf32>, vector<32x128xf32>, vector<8x128xf32> -> vector<8x128xf32>
    %138 = arith.addf %136, %137 : vector<8x128xf32>
    %139 = vector.extract_strided_slice %138 {offsets = [0, 0], sizes = [8, 96], strides = [1, 1]} : vector<8x128xf32> to vector<8x96xf32>
    %140 = arith.negf %139 : vector<8x96xf32>
    %141 = math.exp %140 : vector<8x96xf32>
    %cst_36 = arith.constant 1.000000e+00 : f32
    %142 = vector.broadcast %cst_36 : f32 to vector<8x96xf32>
    %143 = arith.addf %142, %141 : vector<8x96xf32>
    %144 = arith.divf %142, %143 : vector<8x96xf32>
    %145 = vector.extract_strided_slice %144 {offsets = [0, 0], sizes = [8, 32], strides = [1, 1]} : vector<8x96xf32> to vector<8x32xf32>
    %146 = vector.extract_strided_slice %144 {offsets = [0, 32], sizes = [8, 32], strides = [1, 1]} : vector<8x96xf32> to vector<8x32xf32>
    %147 = vector.extract_strided_slice %144 {offsets = [0, 64], sizes = [8, 32], strides = [1, 1]} : vector<8x96xf32> to vector<8x32xf32>
    %148 = vector.extract_strided_slice %138 {offsets = [0, 96], sizes = [8, 32], strides = [1, 1]} : vector<8x128xf32> to vector<8x32xf32>
    %149 = math.tanh %148 : vector<8x32xf32>
    %150 = arith.mulf %146, %132 : vector<8x32xf32>
    %151 = arith.mulf %145, %149 : vector<8x32xf32>
    %152 = arith.addf %150, %151 : vector<8x32xf32>
    %153 = math.tanh %152 : vector<8x32xf32>
    %154 = arith.mulf %147, %153 : vector<8x32xf32>
    %c48 = arith.constant 48 : index
    %c0_37 = arith.constant 0 : index
    %155 = vector.load %arg11[%c48, %c0_37] : memref<64x32xf32, #tpu.memory_space<vmem>>, vector<8x32xf32>
    tpu.vector_store %arg11[%c48, %c0_37], %154 {strides = array<i32>} : memref<64x32xf32, #tpu.memory_space<vmem>>, vector<8x32xf32>,
    %156 = vector.extract_strided_slice %9 {offsets = [56, 0], sizes = [8, 128], strides = [1, 1]} : vector<64x128xf32> to vector<8x128xf32>
    %cst_38 = arith.constant dense<0.000000e+00> : vector<8x128xf32>
    %157 = tpu.matmul %154, %11, %cst_38 {dimension_numbers = #tpu.dot_dimension_numbers<[1], [0], [0], [1], [0, 0, 1, 1], [], []>} : vector<8x32xf32>, vector<32x128xf32>, vector<8x128xf32> -> vector<8x128xf32>
    %158 = arith.addf %156, %157 : vector<8x128xf32>
    %159 = vector.extract_strided_slice %158 {offsets = [0, 0], sizes = [8, 96], strides = [1, 1]} : vector<8x128xf32> to vector<8x96xf32>
    %160 = arith.negf %159 : vector<8x96xf32>
    %161 = math.exp %160 : vector<8x96xf32>
    %cst_39 = arith.constant 1.000000e+00 : f32
    %162 = vector.broadcast %cst_39 : f32 to vector<8x96xf32>
    %163 = arith.addf %162, %161 : vector<8x96xf32>
    %164 = arith.divf %162, %163 : vector<8x96xf32>
    %165 = vector.extract_strided_slice %164 {offsets = [0, 0], sizes = [8, 32], strides = [1, 1]} : vector<8x96xf32> to vector<8x32xf32>
    %166 = vector.extract_strided_slice %164 {offsets = [0, 32], sizes = [8, 32], strides = [1, 1]} : vector<8x96xf32> to vector<8x32xf32>
    %167 = vector.extract_strided_slice %164 {offsets = [0, 64], sizes = [8, 32], strides = [1, 1]} : vector<8x96xf32> to vector<8x32xf32>
    %168 = vector.extract_strided_slice %158 {offsets = [0, 96], sizes = [8, 32], strides = [1, 1]} : vector<8x128xf32> to vector<8x32xf32>
    %169 = math.tanh %168 : vector<8x32xf32>
    %170 = arith.mulf %166, %152 : vector<8x32xf32>
    %171 = arith.mulf %165, %169 : vector<8x32xf32>
    %172 = arith.addf %170, %171 : vector<8x32xf32>
    %173 = math.tanh %172 : vector<8x32xf32>
    %174 = arith.mulf %167, %173 : vector<8x32xf32>
    %c56 = arith.constant 56 : index
    %c0_40 = arith.constant 0 : index
    %175 = vector.load %arg11[%c56, %c0_40] : memref<64x32xf32, #tpu.memory_space<vmem>>, vector<8x32xf32>
    tpu.vector_store %arg11[%c56, %c0_40], %174 {strides = array<i32>} : memref<64x32xf32, #tpu.memory_space<vmem>>, vector<8x32xf32>,
    %c0_41 = arith.constant 0 : index
    %c0_42 = arith.constant 0 : index
    %c0_43 = arith.constant 0 : index
    %176 = vector.load %arg9[%c0_41, %c0_42, %c0_43] : memref<2x8x32xf32, #tpu.memory_space<vmem>>, vector<1x8x32xf32>
    %177 = vector.shape_cast %176 : vector<1x8x32xf32> to vector<8x32xf32>
    %178 = vector.shape_cast %174 : vector<8x32xf32> to vector<1x8x32xf32>
    tpu.vector_store %arg9[%c0_41, %c0_42, %c0_43], %178 {strides = array<i32>} : memref<2x8x32xf32, #tpu.memory_space<vmem>>, vector<1x8x32xf32>,
    %c0_44 = arith.constant 0 : index
    %c0_45 = arith.constant 0 : index
    %c0_46 = arith.constant 0 : index
    %179 = vector.load %arg10[%c0_44, %c0_45, %c0_46] : memref<2x8x32xf32, #tpu.memory_space<vmem>>, vector<1x8x32xf32>
    %180 = vector.shape_cast %179 : vector<1x8x32xf32> to vector<8x32xf32>
    %181 = vector.shape_cast %172 : vector<8x32xf32> to vector<1x8x32xf32>
    tpu.vector_store %arg10[%c0_44, %c0_45, %c0_46], %181 {strides = array<i32>} : memref<2x8x32xf32, #tpu.memory_space<vmem>>, vector<1x8x32xf32>,
    %c0_47 = arith.constant 0 : index
    %c0_48 = arith.constant 0 : index
    %182 = vector.load %arg11[%c0_47, %c0_48] : memref<64x32xf32, #tpu.memory_space<vmem>>, vector<64x32xf32>
    %c0_49 = arith.constant 0 : index
    %c0_50 = arith.constant 0 : index
    %c0_51 = arith.constant 0 : index
    %183 = vector.load %arg3[%c0_49, %c0_50, %c0_51] : memref<1x32x128xf32, #tpu.memory_space<vmem>>, vector<1x32x128xf32>
    %184 = vector.shape_cast %183 : vector<1x32x128xf32> to vector<32x128xf32>
    %cst_52 = arith.constant dense<0.000000e+00> : vector<64x128xf32>
    %185 = tpu.matmul %182, %184, %cst_52 {dimension_numbers = #tpu.dot_dimension_numbers<[1], [0], [0], [1], [0, 0, 1, 1], [], []>} : vector<64x32xf32>, vector<32x128xf32>, vector<64x128xf32> -> vector<64x128xf32>
    %c1 = arith.constant 1 : index
    %c0_53 = arith.constant 0 : index
    %c0_54 = arith.constant 0 : index
    %186 = vector.load %arg5[%c1, %c0_53, %c0_54] : memref<2x1x128xf32, #tpu.memory_space<vmem>>, vector<1x1x128xf32>
    %187 = vector.shape_cast %186 : vector<1x1x128xf32> to vector<1x128xf32>
    %188 = vector.broadcast %187 : vector<1x128xf32> to vector<64x128xf32>
    %189 = arith.addf %185, %188 : vector<64x128xf32>
    %c1_55 = arith.constant 1 : index
    %c0_56 = arith.constant 0 : index
    %c0_57 = arith.constant 0 : index
    %190 = vector.load %arg4[%c1_55, %c0_56, %c0_57] : memref<2x32x128xf32, #tpu.memory_space<vmem>>, vector<1x32x128xf32>
    %191 = vector.shape_cast %190 : vector<1x32x128xf32> to vector<32x128xf32>
    %c1_58 = arith.constant 1 : index
    %c0_59 = arith.constant 0 : index
    %c0_60 = arith.constant 0 : index
    %192 = vector.load %arg9[%c1_58, %c0_59, %c0_60] : memref<2x8x32xf32, #tpu.memory_space<vmem>>, vector<1x8x32xf32>
    %193 = vector.shape_cast %192 : vector<1x8x32xf32> to vector<8x32xf32>
    %c1_61 = arith.constant 1 : index
    %c0_62 = arith.constant 0 : index
    %c0_63 = arith.constant 0 : index
    %194 = vector.load %arg10[%c1_61, %c0_62, %c0_63] : memref<2x8x32xf32, #tpu.memory_space<vmem>>, vector<1x8x32xf32>
    %195 = vector.shape_cast %194 : vector<1x8x32xf32> to vector<8x32xf32>
    %196 = vector.extract_strided_slice %189 {offsets = [0, 0], sizes = [8, 128], strides = [1, 1]} : vector<64x128xf32> to vector<8x128xf32>
    %cst_64 = arith.constant dense<0.000000e+00> : vector<8x128xf32>
    %197 = tpu.matmul %193, %191, %cst_64 {dimension_numbers = #tpu.dot_dimension_numbers<[1], [0], [0], [1], [0, 0, 1, 1], [], []>} : vector<8x32xf32>, vector<32x128xf32>, vector<8x128xf32> -> vector<8x128xf32>
    %198 = arith.addf %196, %197 : vector<8x128xf32>
    %199 = vector.extract_strided_slice %198 {offsets = [0, 0], sizes = [8, 96], strides = [1, 1]} : vector<8x128xf32> to vector<8x96xf32>
    %200 = arith.negf %199 : vector<8x96xf32>
    %201 = math.exp %200 : vector<8x96xf32>
    %cst_65 = arith.constant 1.000000e+00 : f32
    %202 = vector.broadcast %cst_65 : f32 to vector<8x96xf32>
    %203 = arith.addf %202, %201 : vector<8x96xf32>
    %204 = arith.divf %202, %203 : vector<8x96xf32>
    %205 = vector.extract_strided_slice %204 {offsets = [0, 0], sizes = [8, 32], strides = [1, 1]} : vector<8x96xf32> to vector<8x32xf32>
    %206 = vector.extract_strided_slice %204 {offsets = [0, 32], sizes = [8, 32], strides = [1, 1]} : vector<8x96xf32> to vector<8x32xf32>
    %207 = vector.extract_strided_slice %204 {offsets = [0, 64], sizes = [8, 32], strides = [1, 1]} : vector<8x96xf32> to vector<8x32xf32>
    %208 = vector.extract_strided_slice %198 {offsets = [0, 96], sizes = [8, 32], strides = [1, 1]} : vector<8x128xf32> to vector<8x32xf32>
    %209 = math.tanh %208 : vector<8x32xf32>
    %210 = arith.mulf %206, %195 : vector<8x32xf32>
    %211 = arith.mulf %205, %209 : vector<8x32xf32>
    %212 = arith.addf %210, %211 : vector<8x32xf32>
    %213 = math.tanh %212 : vector<8x32xf32>
    %214 = arith.mulf %207, %213 : vector<8x32xf32>
    %215 = vector.extract_strided_slice %189 {offsets = [8, 0], sizes = [8, 128], strides = [1, 1]} : vector<64x128xf32> to vector<8x128xf32>
    %cst_66 = arith.constant dense<0.000000e+00> : vector<8x128xf32>
    %216 = tpu.matmul %214, %191, %cst_66 {dimension_numbers = #tpu.dot_dimension_numbers<[1], [0], [0], [1], [0, 0, 1, 1], [], []>} : vector<8x32xf32>, vector<32x128xf32>, vector<8x128xf32> -> vector<8x128xf32>
    %217 = arith.addf %215, %216 : vector<8x128xf32>
    %218 = vector.extract_strided_slice %217 {offsets = [0, 0], sizes = [8, 96], strides = [1, 1]} : vector<8x128xf32> to vector<8x96xf32>
    %219 = arith.negf %218 : vector<8x96xf32>
    %220 = math.exp %219 : vector<8x96xf32>
    %cst_67 = arith.constant 1.000000e+00 : f32
    %221 = vector.broadcast %cst_67 : f32 to vector<8x96xf32>
    %222 = arith.addf %221, %220 : vector<8x96xf32>
    %223 = arith.divf %221, %222 : vector<8x96xf32>
    %224 = vector.extract_strided_slice %223 {offsets = [0, 0], sizes = [8, 32], strides = [1, 1]} : vector<8x96xf32> to vector<8x32xf32>
    %225 = vector.extract_strided_slice %223 {offsets = [0, 32], sizes = [8, 32], strides = [1, 1]} : vector<8x96xf32> to vector<8x32xf32>
    %226 = vector.extract_strided_slice %223 {offsets = [0, 64], sizes = [8, 32], strides = [1, 1]} : vector<8x96xf32> to vector<8x32xf32>
    %227 = vector.extract_strided_slice %217 {offsets = [0, 96], sizes = [8, 32], strides = [1, 1]} : vector<8x128xf32> to vector<8x32xf32>
    %228 = math.tanh %227 : vector<8x32xf32>
    %229 = arith.mulf %225, %212 : vector<8x32xf32>
    %230 = arith.mulf %224, %228 : vector<8x32xf32>
    %231 = arith.addf %229, %230 : vector<8x32xf32>
    %232 = math.tanh %231 : vector<8x32xf32>
    %233 = arith.mulf %226, %232 : vector<8x32xf32>
    %234 = vector.extract_strided_slice %189 {offsets = [16, 0], sizes = [8, 128], strides = [1, 1]} : vector<64x128xf32> to vector<8x128xf32>
    %cst_68 = arith.constant dense<0.000000e+00> : vector<8x128xf32>
    %235 = tpu.matmul %233, %191, %cst_68 {dimension_numbers = #tpu.dot_dimension_numbers<[1], [0], [0], [1], [0, 0, 1, 1], [], []>} : vector<8x32xf32>, vector<32x128xf32>, vector<8x128xf32> -> vector<8x128xf32>
    %236 = arith.addf %234, %235 : vector<8x128xf32>
    %237 = vector.extract_strided_slice %236 {offsets = [0, 0], sizes = [8, 96], strides = [1, 1]} : vector<8x128xf32> to vector<8x96xf32>
    %238 = arith.negf %237 : vector<8x96xf32>
    %239 = math.exp %238 : vector<8x96xf32>
    %cst_69 = arith.constant 1.000000e+00 : f32
    %240 = vector.broadcast %cst_69 : f32 to vector<8x96xf32>
    %241 = arith.addf %240, %239 : vector<8x96xf32>
    %242 = arith.divf %240, %241 : vector<8x96xf32>
    %243 = vector.extract_strided_slice %242 {offsets = [0, 0], sizes = [8, 32], strides = [1, 1]} : vector<8x96xf32> to vector<8x32xf32>
    %244 = vector.extract_strided_slice %242 {offsets = [0, 32], sizes = [8, 32], strides = [1, 1]} : vector<8x96xf32> to vector<8x32xf32>
    %245 = vector.extract_strided_slice %242 {offsets = [0, 64], sizes = [8, 32], strides = [1, 1]} : vector<8x96xf32> to vector<8x32xf32>
    %246 = vector.extract_strided_slice %236 {offsets = [0, 96], sizes = [8, 32], strides = [1, 1]} : vector<8x128xf32> to vector<8x32xf32>
    %247 = math.tanh %246 : vector<8x32xf32>
    %248 = arith.mulf %244, %231 : vector<8x32xf32>
    %249 = arith.mulf %243, %247 : vector<8x32xf32>
    %250 = arith.addf %248, %249 : vector<8x32xf32>
    %251 = math.tanh %250 : vector<8x32xf32>
    %252 = arith.mulf %245, %251 : vector<8x32xf32>
    %253 = vector.extract_strided_slice %189 {offsets = [24, 0], sizes = [8, 128], strides = [1, 1]} : vector<64x128xf32> to vector<8x128xf32>
    %cst_70 = arith.constant dense<0.000000e+00> : vector<8x128xf32>
    %254 = tpu.matmul %252, %191, %cst_70 {dimension_numbers = #tpu.dot_dimension_numbers<[1], [0], [0], [1], [0, 0, 1, 1], [], []>} : vector<8x32xf32>, vector<32x128xf32>, vector<8x128xf32> -> vector<8x128xf32>
    %255 = arith.addf %253, %254 : vector<8x128xf32>
    %256 = vector.extract_strided_slice %255 {offsets = [0, 0], sizes = [8, 96], strides = [1, 1]} : vector<8x128xf32> to vector<8x96xf32>
    %257 = arith.negf %256 : vector<8x96xf32>
    %258 = math.exp %257 : vector<8x96xf32>
    %cst_71 = arith.constant 1.000000e+00 : f32
    %259 = vector.broadcast %cst_71 : f32 to vector<8x96xf32>
    %260 = arith.addf %259, %258 : vector<8x96xf32>
    %261 = arith.divf %259, %260 : vector<8x96xf32>
    %262 = vector.extract_strided_slice %261 {offsets = [0, 0], sizes = [8, 32], strides = [1, 1]} : vector<8x96xf32> to vector<8x32xf32>
    %263 = vector.extract_strided_slice %261 {offsets = [0, 32], sizes = [8, 32], strides = [1, 1]} : vector<8x96xf32> to vector<8x32xf32>
    %264 = vector.extract_strided_slice %261 {offsets = [0, 64], sizes = [8, 32], strides = [1, 1]} : vector<8x96xf32> to vector<8x32xf32>
    %265 = vector.extract_strided_slice %255 {offsets = [0, 96], sizes = [8, 32], strides = [1, 1]} : vector<8x128xf32> to vector<8x32xf32>
    %266 = math.tanh %265 : vector<8x32xf32>
    %267 = arith.mulf %263, %250 : vector<8x32xf32>
    %268 = arith.mulf %262, %266 : vector<8x32xf32>
    %269 = arith.addf %267, %268 : vector<8x32xf32>
    %270 = math.tanh %269 : vector<8x32xf32>
    %271 = arith.mulf %264, %270 : vector<8x32xf32>
    %272 = vector.extract_strided_slice %189 {offsets = [32, 0], sizes = [8, 128], strides = [1, 1]} : vector<64x128xf32> to vector<8x128xf32>
    %cst_72 = arith.constant dense<0.000000e+00> : vector<8x128xf32>
    %273 = tpu.matmul %271, %191, %cst_72 {dimension_numbers = #tpu.dot_dimension_numbers<[1], [0], [0], [1], [0, 0, 1, 1], [], []>} : vector<8x32xf32>, vector<32x128xf32>, vector<8x128xf32> -> vector<8x128xf32>
    %274 = arith.addf %272, %273 : vector<8x128xf32>
    %275 = vector.extract_strided_slice %274 {offsets = [0, 0], sizes = [8, 96], strides = [1, 1]} : vector<8x128xf32> to vector<8x96xf32>
    %276 = arith.negf %275 : vector<8x96xf32>
    %277 = math.exp %276 : vector<8x96xf32>
    %cst_73 = arith.constant 1.000000e+00 : f32
    %278 = vector.broadcast %cst_73 : f32 to vector<8x96xf32>
    %279 = arith.addf %278, %277 : vector<8x96xf32>
    %280 = arith.divf %278, %279 : vector<8x96xf32>
    %281 = vector.extract_strided_slice %280 {offsets = [0, 0], sizes = [8, 32], strides = [1, 1]} : vector<8x96xf32> to vector<8x32xf32>
    %282 = vector.extract_strided_slice %280 {offsets = [0, 32], sizes = [8, 32], strides = [1, 1]} : vector<8x96xf32> to vector<8x32xf32>
    %283 = vector.extract_strided_slice %280 {offsets = [0, 64], sizes = [8, 32], strides = [1, 1]} : vector<8x96xf32> to vector<8x32xf32>
    %284 = vector.extract_strided_slice %274 {offsets = [0, 96], sizes = [8, 32], strides = [1, 1]} : vector<8x128xf32> to vector<8x32xf32>
    %285 = math.tanh %284 : vector<8x32xf32>
    %286 = arith.mulf %282, %269 : vector<8x32xf32>
    %287 = arith.mulf %281, %285 : vector<8x32xf32>
    %288 = arith.addf %286, %287 : vector<8x32xf32>
    %289 = math.tanh %288 : vector<8x32xf32>
    %290 = arith.mulf %283, %289 : vector<8x32xf32>
    %291 = vector.extract_strided_slice %189 {offsets = [40, 0], sizes = [8, 128], strides = [1, 1]} : vector<64x128xf32> to vector<8x128xf32>
    %cst_74 = arith.constant dense<0.000000e+00> : vector<8x128xf32>
    %292 = tpu.matmul %290, %191, %cst_74 {dimension_numbers = #tpu.dot_dimension_numbers<[1], [0], [0], [1], [0, 0, 1, 1], [], []>} : vector<8x32xf32>, vector<32x128xf32>, vector<8x128xf32> -> vector<8x128xf32>
    %293 = arith.addf %291, %292 : vector<8x128xf32>
    %294 = vector.extract_strided_slice %293 {offsets = [0, 0], sizes = [8, 96], strides = [1, 1]} : vector<8x128xf32> to vector<8x96xf32>
    %295 = arith.negf %294 : vector<8x96xf32>
    %296 = math.exp %295 : vector<8x96xf32>
    %cst_75 = arith.constant 1.000000e+00 : f32
    %297 = vector.broadcast %cst_75 : f32 to vector<8x96xf32>
    %298 = arith.addf %297, %296 : vector<8x96xf32>
    %299 = arith.divf %297, %298 : vector<8x96xf32>
    %300 = vector.extract_strided_slice %299 {offsets = [0, 0], sizes = [8, 32], strides = [1, 1]} : vector<8x96xf32> to vector<8x32xf32>
    %301 = vector.extract_strided_slice %299 {offsets = [0, 32], sizes = [8, 32], strides = [1, 1]} : vector<8x96xf32> to vector<8x32xf32>
    %302 = vector.extract_strided_slice %299 {offsets = [0, 64], sizes = [8, 32], strides = [1, 1]} : vector<8x96xf32> to vector<8x32xf32>
    %303 = vector.extract_strided_slice %293 {offsets = [0, 96], sizes = [8, 32], strides = [1, 1]} : vector<8x128xf32> to vector<8x32xf32>
    %304 = math.tanh %303 : vector<8x32xf32>
    %305 = arith.mulf %301, %288 : vector<8x32xf32>
    %306 = arith.mulf %300, %304 : vector<8x32xf32>
    %307 = arith.addf %305, %306 : vector<8x32xf32>
    %308 = math.tanh %307 : vector<8x32xf32>
    %309 = arith.mulf %302, %308 : vector<8x32xf32>
    %310 = vector.extract_strided_slice %189 {offsets = [48, 0], sizes = [8, 128], strides = [1, 1]} : vector<64x128xf32> to vector<8x128xf32>
    %cst_76 = arith.constant dense<0.000000e+00> : vector<8x128xf32>
    %311 = tpu.matmul %309, %191, %cst_76 {dimension_numbers = #tpu.dot_dimension_numbers<[1], [0], [0], [1], [0, 0, 1, 1], [], []>} : vector<8x32xf32>, vector<32x128xf32>, vector<8x128xf32> -> vector<8x128xf32>
    %312 = arith.addf %310, %311 : vector<8x128xf32>
    %313 = vector.extract_strided_slice %312 {offsets = [0, 0], sizes = [8, 96], strides = [1, 1]} : vector<8x128xf32> to vector<8x96xf32>
    %314 = arith.negf %313 : vector<8x96xf32>
    %315 = math.exp %314 : vector<8x96xf32>
    %cst_77 = arith.constant 1.000000e+00 : f32
    %316 = vector.broadcast %cst_77 : f32 to vector<8x96xf32>
    %317 = arith.addf %316, %315 : vector<8x96xf32>
    %318 = arith.divf %316, %317 : vector<8x96xf32>
    %319 = vector.extract_strided_slice %318 {offsets = [0, 0], sizes = [8, 32], strides = [1, 1]} : vector<8x96xf32> to vector<8x32xf32>
    %320 = vector.extract_strided_slice %318 {offsets = [0, 32], sizes = [8, 32], strides = [1, 1]} : vector<8x96xf32> to vector<8x32xf32>
    %321 = vector.extract_strided_slice %318 {offsets = [0, 64], sizes = [8, 32], strides = [1, 1]} : vector<8x96xf32> to vector<8x32xf32>
    %322 = vector.extract_strided_slice %312 {offsets = [0, 96], sizes = [8, 32], strides = [1, 1]} : vector<8x128xf32> to vector<8x32xf32>
    %323 = math.tanh %322 : vector<8x32xf32>
    %324 = arith.mulf %320, %307 : vector<8x32xf32>
    %325 = arith.mulf %319, %323 : vector<8x32xf32>
    %326 = arith.addf %324, %325 : vector<8x32xf32>
    %327 = math.tanh %326 : vector<8x32xf32>
    %328 = arith.mulf %321, %327 : vector<8x32xf32>
    %329 = vector.extract_strided_slice %189 {offsets = [56, 0], sizes = [8, 128], strides = [1, 1]} : vector<64x128xf32> to vector<8x128xf32>
    %cst_78 = arith.constant dense<0.000000e+00> : vector<8x128xf32>
    %330 = tpu.matmul %328, %191, %cst_78 {dimension_numbers = #tpu.dot_dimension_numbers<[1], [0], [0], [1], [0, 0, 1, 1], [], []>} : vector<8x32xf32>, vector<32x128xf32>, vector<8x128xf32> -> vector<8x128xf32>
    %331 = arith.addf %329, %330 : vector<8x128xf32>
    %332 = vector.extract_strided_slice %331 {offsets = [0, 0], sizes = [8, 96], strides = [1, 1]} : vector<8x128xf32> to vector<8x96xf32>
    %333 = arith.negf %332 : vector<8x96xf32>
    %334 = math.exp %333 : vector<8x96xf32>
    %cst_79 = arith.constant 1.000000e+00 : f32
    %335 = vector.broadcast %cst_79 : f32 to vector<8x96xf32>
    %336 = arith.addf %335, %334 : vector<8x96xf32>
    %337 = arith.divf %335, %336 : vector<8x96xf32>
    %338 = vector.extract_strided_slice %337 {offsets = [0, 0], sizes = [8, 32], strides = [1, 1]} : vector<8x96xf32> to vector<8x32xf32>
    %339 = vector.extract_strided_slice %337 {offsets = [0, 32], sizes = [8, 32], strides = [1, 1]} : vector<8x96xf32> to vector<8x32xf32>
    %340 = vector.extract_strided_slice %337 {offsets = [0, 64], sizes = [8, 32], strides = [1, 1]} : vector<8x96xf32> to vector<8x32xf32>
    %341 = vector.extract_strided_slice %331 {offsets = [0, 96], sizes = [8, 32], strides = [1, 1]} : vector<8x128xf32> to vector<8x32xf32>
    %342 = math.tanh %341 : vector<8x32xf32>
    %343 = arith.mulf %339, %326 : vector<8x32xf32>
    %344 = arith.mulf %338, %342 : vector<8x32xf32>
    %345 = arith.addf %343, %344 : vector<8x32xf32>
    %346 = math.tanh %345 : vector<8x32xf32>
    %347 = arith.mulf %340, %346 : vector<8x32xf32>
    %c1_80 = arith.constant 1 : index
    %c0_81 = arith.constant 0 : index
    %c0_82 = arith.constant 0 : index
    %348 = vector.load %arg9[%c1_80, %c0_81, %c0_82] : memref<2x8x32xf32, #tpu.memory_space<vmem>>, vector<1x8x32xf32>
    %349 = vector.shape_cast %348 : vector<1x8x32xf32> to vector<8x32xf32>
    %350 = vector.shape_cast %347 : vector<8x32xf32> to vector<1x8x32xf32>
    tpu.vector_store %arg9[%c1_80, %c0_81, %c0_82], %350 {strides = array<i32>} : memref<2x8x32xf32, #tpu.memory_space<vmem>>, vector<1x8x32xf32>,
    %c1_83 = arith.constant 1 : index
    %c0_84 = arith.constant 0 : index
    %c0_85 = arith.constant 0 : index
    %351 = vector.load %arg10[%c1_83, %c0_84, %c0_85] : memref<2x8x32xf32, #tpu.memory_space<vmem>>, vector<1x8x32xf32>
    %352 = vector.shape_cast %351 : vector<1x8x32xf32> to vector<8x32xf32>
    %353 = vector.shape_cast %345 : vector<8x32xf32> to vector<1x8x32xf32>
    tpu.vector_store %arg10[%c1_83, %c0_84, %c0_85], %353 {strides = array<i32>} : memref<2x8x32xf32, #tpu.memory_space<vmem>>, vector<1x8x32xf32>,
    %c0_i32_86 = arith.constant 0 : i32
    %354 = arith.cmpi eq, %arg0, %c0_i32_86 : i32
    %355 = arith.extui %354 : i1 to i32
    %c0_i32_87 = arith.constant 0 : i32
    %356 = arith.cmpi ne, %355, %c0_i32_87 : i32
    scf.if %356 {
      %c0_88 = arith.constant 0 : index
      %c0_89 = arith.constant 0 : index
      %357 = vector.load %arg6[%c0_88, %c0_89] : memref<32x3xf32, #tpu.memory_space<vmem>>, vector<32x3xf32>
      %cst_90 = arith.constant dense<0.000000e+00> : vector<8x3xf32>
      %358 = tpu.matmul %347, %357, %cst_90 {dimension_numbers = #tpu.dot_dimension_numbers<[1], [0], [0], [1], [0, 0, 1, 1], [], []>} : vector<8x32xf32>, vector<32x3xf32>, vector<8x3xf32> -> vector<8x3xf32>
      %c0_91 = arith.constant 0 : index
      %c0_92 = arith.constant 0 : index
      %359 = vector.load %arg7[%c0_91, %c0_92] : memref<1x3xf32, #tpu.memory_space<vmem>>, vector<1x3xf32>
      %360 = vector.broadcast %359 : vector<1x3xf32> to vector<8x3xf32>
      %361 = arith.addf %358, %360 : vector<8x3xf32>
      %c0_93 = arith.constant 0 : index
      %c0_94 = arith.constant 0 : index
      %362 = vector.load %arg8[%c0_93, %c0_94] : memref<8x3xf32, #tpu.memory_space<vmem>>, vector<8x3xf32>
      tpu.vector_store %arg8[%c0_93, %c0_94], %361 {strides = array<i32>} : memref<8x3xf32, #tpu.memory_space<vmem>>, vector<8x3xf32>,
    } else {
    }
    return
  }
  func.func @transform_0(%arg0: i32) -> (i32, i32) {
    %c0_i32 = arith.constant 0 : i32
    %c0_i32_0 = arith.constant 0 : i32
    return %arg0, %c0_i32 : i32, i32
  }
  func.func @transform_1(%arg0: i32) -> (i32, i32) {
    %c0_i32 = arith.constant 0 : i32
    %c0_i32_0 = arith.constant 0 : i32
    %c0_i32_1 = arith.constant 0 : i32
    return %c0_i32, %c0_i32_0 : i32, i32
  }
  func.func @transform_2(%arg0: i32) -> (i32, i32, i32) {
    %c0_i32 = arith.constant 0 : i32
    %c0_i32_0 = arith.constant 0 : i32
    %c0_i32_1 = arith.constant 0 : i32
    %c0_i32_2 = arith.constant 0 : i32
    return %c0_i32, %c0_i32_0, %c0_i32_1 : i32, i32, i32
  }
  func.func @transform_3(%arg0: i32) -> (i32, i32, i32) {
    %c0_i32 = arith.constant 0 : i32
    %c0_i32_0 = arith.constant 0 : i32
    %c0_i32_1 = arith.constant 0 : i32
    %c0_i32_2 = arith.constant 0 : i32
    return %c0_i32, %c0_i32_0, %c0_i32_1 : i32, i32, i32
  }
  func.func @transform_4(%arg0: i32) -> (i32, i32, i32) {
    %c0_i32 = arith.constant 0 : i32
    %c0_i32_0 = arith.constant 0 : i32
    %c0_i32_1 = arith.constant 0 : i32
    %c0_i32_2 = arith.constant 0 : i32
    return %c0_i32, %c0_i32_0, %c0_i32_1 : i32, i32, i32
  }
  func.func @transform_5(%arg0: i32) -> (i32, i32) {
    %c0_i32 = arith.constant 0 : i32
    %c0_i32_0 = arith.constant 0 : i32
    %c0_i32_1 = arith.constant 0 : i32
    return %c0_i32, %c0_i32_0 : i32, i32
  }
  func.func @transform_6(%arg0: i32) -> (i32, i32) {
    %c0_i32 = arith.constant 0 : i32
    %c0_i32_0 = arith.constant 0 : i32
    %c0_i32_1 = arith.constant 0 : i32
    return %c0_i32, %c0_i32_0 : i32, i32
  }
  func.func @transform_7(%arg0: i32) -> (i32, i32) {
    %c0_i32 = arith.constant 0 : i32
    %c0_i32_0 = arith.constant 0 : i32
    %c0_i32_1 = arith.constant 0 : i32
    return %c0_i32, %c0_i32_0 : i32, i32
  }
}

</mosaic_0001>

<llo_original>
// kernel: tpu_custom_call.1
$region0: #{tpu_custom_call.1}
  #allocation0 [shape = 'u32[]', space=smem, size = 0x4, offset = 0x4, fixed_abs, tag = 'smem constant byte address 0x4 - core index']
  #allocation1 [shape = 'u32[144,128]{1,0:T(1,128)}', space=vmem, size = 0x12000, scoped, tag = 'internal scratch']
  #allocation2 [shape = 'f32[2,8,32]{2,1,0:T(8,128)}', space=vmem, size = 0x2000, scoped, tag = 'scratch operand']
  #allocation3 [shape = 'f32[2,8,32]{2,1,0:T(8,128)}', space=vmem, size = 0x2000, scoped, tag = 'scratch operand']
  #allocation4 [shape = 'f32[64,32]{1,0:T(8,128)}', space=vmem, size = 0x8000, scoped, tag = 'scratch operand']
  #allocation5 [shape = 'f32[64,32]{1,0:T(8,128)}', space=vmem, size = 0x8000, scoped, tag = 'scratch operand']
  %s0 = inlined_call_operand.vmem [shape: f32[64,4], index: 0, kind: input, shape index: {}]
  %s1 = inlined_call_operand.vmem [shape: f32[4,128], index: 1, kind: input, shape index: {}]
  %s2 = inlined_call_operand.vmem [shape: f32[1,32,128], index: 2, kind: input, shape index: {}]
  %s3 = inlined_call_operand.vmem [shape: f32[2,32,128], index: 3, kind: input, shape index: {}]
  %s4 = inlined_call_operand.vmem [shape: f32[2,1,128], index: 4, kind: input, shape index: {}]
  %s5 = inlined_call_operand.vmem [shape: f32[32,3], index: 5, kind: input, shape index: {}]
  %s6 = inlined_call_operand.vmem [shape: f32[1,3], index: 6, kind: input, shape index: {}]
  %s7 = inlined_call_operand.vmem [shape: f32[8,3], index: 7, kind: output, shape index: {}]
  %s8 = sld [smem:[#allocation0]]
  $region46: #{tpu_custom_call.1} parent=0
    _
  %s10 = ssub.s32 1, %s8
  %s11 = scalar_select 0, %s10, %s8
  // Predicated region
  $region2: #{tpu_custom_call.1} parent=0 // pred_check
    _
  $region3: #{tpu_custom_call.1} parent=0 // pred_check_branch
    %13 = sbr.rel (0) target = $region5
  $region4: #{tpu_custom_call.1} parent=0 // pred_region
    _
  $region5: #{tpu_custom_call.1} parent=0 // pred_fallthru
    _
  // Predicated region
  $region6: #{tpu_custom_call.1} parent=0 // pred_check
    _
  $region7: #{tpu_custom_call.1} parent=0 // pred_check_branch
    %15 = sbr.rel (0) target = $region9
  $region8: #{tpu_custom_call.1} parent=0 // pred_region
    _
  $region9: #{tpu_custom_call.1} parent=0 // pred_fallthru
    _
  // Predicated region
  $region10: #{tpu_custom_call.1} parent=0 // pred_check
    _
  $region11: #{tpu_custom_call.1} parent=0 // pred_check_branch
    %17 = sbr.rel (0) target = $region13
  $region12: #{tpu_custom_call.1} parent=0 // pred_region
    _
  $region13: #{tpu_custom_call.1} parent=0 // pred_fallthru
    _
  // Predicated region
  $region14: #{tpu_custom_call.1} parent=0 // pred_check
    _
  $region15: #{tpu_custom_call.1} parent=0 // pred_check_branch
    %19 = sbr.rel (0) target = $region17
  $region16: #{tpu_custom_call.1} parent=0 // pred_region
    _
  $region17: #{tpu_custom_call.1} parent=0 // pred_fallthru
    _
  // Predicated region
  $region18: #{tpu_custom_call.1} parent=0 // pred_check
    _
  $region19: #{tpu_custom_call.1} parent=0 // pred_check_branch
    %21 = sbr.rel (0) target = $region21
  $region20: #{tpu_custom_call.1} parent=0 // pred_region
    _
  $region21: #{tpu_custom_call.1} parent=0 // pred_fallthru
    _
  // Predicated region
  $region22: #{tpu_custom_call.1} parent=0 // pred_check
    _
  $region23: #{tpu_custom_call.1} parent=0 // pred_check_branch
    %23 = sbr.rel (0) target = $region25
  $region24: #{tpu_custom_call.1} parent=0 // pred_region
    _
  $region25: #{tpu_custom_call.1} parent=0 // pred_fallthru
    _
  // Predicated region
  $region26: #{tpu_custom_call.1} parent=0 // pred_check
    _
  $region27: #{tpu_custom_call.1} parent=0 // pred_check_branch
    %25 = sbr.rel (0) target = $region29
  $region28: #{tpu_custom_call.1} parent=0 // pred_region
    _
  $region29: #{tpu_custom_call.1} parent=0 // pred_fallthru
    _
  %p26 = scmp.eq.s32.totalorder 0, 0
  // Predicated region
  $region30: #{tpu_custom_call.1} parent=0 // pred_check
    %p27 = pneg %p26
  $region31: #{tpu_custom_call.1} parent=0 // pred_check_branch
    %29 = sbr.rel (%p27) target = $region33
  $region32: #{tpu_custom_call.1} parent=0 // pred_region
    %vm30 = vcmask 261120
    %31 = vst.msk [vmem:[#allocation2] sm:$0xff] %vm30, 0.0
    %32 = vst.msk [vmem:[#allocation2 + $0x8] sm:$0xff] %vm30, 0.0
    %33 = vst.msk [vmem:[#allocation3] sm:$0xff] %vm30, 0.0
    %34 = vst.msk [vmem:[#allocation3 + $0x8] sm:$0xff] %vm30, 0.0
  $region33: #{tpu_custom_call.1} parent=0 // pred_fallthru
    _
  %v35 = vld [vmem:[%s0] sm:$0xff]
  %v36 = vld [vmem:[%s0 + $0x8] sm:$0xff]
  %v37 = vld [vmem:[%s0 + $0x10] sm:$0xff]
  %v38 = vld [vmem:[%s0 + $0x18] sm:$0xff]
  %v39 = vld [vmem:[%s0 + $0x20] sm:$0xff]
  %v40 = vld [vmem:[%s0 + $0x28] sm:$0xff]
  %v41 = vld [vmem:[%s0 + $0x30] sm:$0xff]
  %v42 = vld [vmem:[%s0 + $0x38] sm:$0xff]
  %v43 = vld [vmem:[%s1] sm:$0xf]
  %v44 = vld [vmem:[%s4] sm:$0x1]
  %v46 = vlaneseq
  %v47 = vshrl.u32 %v46, 7
  %v48 = vsub.s32 0, %v47
  %v49 = vrot.slane %v44, %v48
  %vm51 = vcmask 31744
  %v53 = vsel %vm51, %v35, 0
  %v56 = vsel %vm51, %v36, 0
  %v59 = vsel %vm51, %v37, 0
  %v62 = vsel %vm51, %v38, 0
  %v65 = vsel %vm51, %v39, 0
  %v68 = vsel %vm51, %v40, 0
  %v71 = vsel %vm51, %v41, 0
  %v74 = vsel %vm51, %v42, 0
  %vm76 = vcmask 1043456
  %v78 = vsel %vm76, %v43, 0
  %80 = vmatprep.subr.mxu0 0.0
  %81 = vmatpush1.msra.mxu0 %v78
  %82 = vmatprep.subr.mxu0 0.0
  %83 = vmatpush1.msra.mxu0 0.0
  %84 = vmatprep.subr.mxu0 0.0
  %85 = vmatpush1.msra.mxu0 0.0
  %86 = vmatprep.subr.mxu0 0.0
  %87 = vmatpush1.msra.mxu0 0.0
  %88 = vmatprep.subr.mxu0 0.0
  %89 = vmatpush1.msra.mxu0 0.0
  %90 = vmatprep.subr.mxu0 0.0
  %91 = vmatpush1.msra.mxu0 0.0
  %92 = vmatprep.subr.mxu0 0.0
  %93 = vmatpush1.msra.mxu0 0.0
  %94 = vmatprep.subr.mxu0 0.0
  %95 = vmatpush1.msra.mxu0 0.0
  %96 = vmatprep.subr.mxu0 0.0
  %97 = vmatpush1.msra.mxu0 0.0
  %98 = vmatprep.subr.mxu0 0.0
  %99 = vmatpush1.msra.mxu0 0.0
  %100 = vmatprep.subr.mxu0 0.0
  %101 = vmatpush1.msra.mxu0 0.0
  %102 = vmatprep.subr.mxu0 0.0
  %103 = vmatpush1.msra.mxu0 0.0
  %104 = vmatprep.subr.mxu0 0.0
  %105 = vmatpush1.msra.mxu0 0.0
  %106 = vmatprep.subr.mxu0 0.0
  %107 = vmatpush1.msra.mxu0 0.0
  %108 = vmatprep.subr.mxu0 0.0
  %109 = vmatpush1.msra.mxu0 0.0
  %110 = vmatprep.subr.mxu0 0.0
  %111 = vmatpush1.msra.mxu0 0.0
  %112 = vmatprep.subr.mxu0 0.0
  %113 = vmatpush1.msra.mxu0 0.0
  %114 = vmatprep.subr.mxu0 0.0
  %115 = vmatpush1.msra.mxu0 0.0
  %116 = vmatprep.subr.mxu0 0.0
  %117 = vmatpush1.msra.mxu0 0.0
  %118 = vmatprep.subr.mxu0 0.0
  %119 = vmatpush1.msra.mxu0 0.0
  %120 = vmatprep.subr.mxu0 0.0
  %121 = vmatpush1.msra.mxu0 0.0
  %122 = vmatprep.subr.mxu0 0.0
  %123 = vmatpush1.msra.mxu0 0.0
  %124 = vmatprep.subr.mxu0 0.0
  %125 = vmatpush1.msra.mxu0 0.0
  %126 = vmatprep.subr.mxu0 0.0
  %127 = vmatpush1.msra.mxu0 0.0
  %128 = vmatprep.subr.mxu0 0.0
  %129 = vmatpush1.msra.mxu0 0.0
  %130 = vmatprep.subr.mxu0 0.0
  %131 = vmatpush1.msra.mxu0 0.0
  %132 = vmatprep.subr.mxu0 0.0
  %133 = vmatpush1.msra.mxu0 0.0
  %134 = vmatprep.subr.mxu0 0.0
  %135 = vmatpush1.msra.mxu0 0.0
  %136 = vmatprep.subr.mxu0 0.0
  %137 = vmatpush1.msra.mxu0 0.0
  %138 = vmatprep.subr.mxu0 0.0
  %139 = vmatpush1.msra.mxu0 0.0
  %140 = vmatprep.subr.mxu0 0.0
  %141 = vmatpush1.msra.mxu0 0.0
  %142 = vmatprep.subr.mxu0 0.0
  %143 = vmatpush1.msra.mxu0 0.0
  %144 = vmatprep.mubr.f32.mxu0 0.0
  %145 = vmatmul.mubr.f32.gmra.mrb[0].mxu0 %v53
  %v146 = vpop.f32.mrb[0].mxu0
  %v147 = vadd.f32 %v49, %v146
  %v148 = vpop.f32.mrb[0].mxu0
  %149 = vmatprep.mubr.f32.mxu0 0.0
  %150 = vmatmul.mubr.f32.gmra.mrb[0].mxu0 %v56
  %v151 = vpop.f32.mrb[0].mxu0
  %v152 = vadd.f32 %v49, %v151
  %v153 = vpop.f32.mrb[0].mxu0
  %154 = vmatprep.mubr.f32.mxu0 0.0
  %155 = vmatmul.mubr.f32.gmra.mrb[0].mxu0 %v59
  %v156 = vpop.f32.mrb[0].mxu0
  %v157 = vadd.f32 %v49, %v156
  %v158 = vpop.f32.mrb[0].mxu0
  %159 = vmatprep.mubr.f32.mxu0 0.0
  %160 = vmatmul.mubr.f32.gmra.mrb[0].mxu0 %v62
  %v161 = vpop.f32.mrb[0].mxu0
  %v162 = vadd.f32 %v49, %v161
  %v163 = vpop.f32.mrb[0].mxu0
  %164 = vmatprep.mubr.f32.mxu0 0.0
  %165 = vmatmul.mubr.f32.gmra.mrb[0].mxu0 %v65
  %v166 = vpop.f32.mrb[0].mxu0
  %v167 = vadd.f32 %v49, %v166
  %v168 = vpop.f32.mrb[0].mxu0
  %169 = vmatprep.mubr.f32.mxu0 0.0
  %170 = vmatmul.mubr.f32.gmra.mrb[0].mxu0 %v68
  %v171 = vpop.f32.mrb[0].mxu0
  %v172 = vadd.f32 %v49, %v171
  %v173 = vpop.f32.mrb[0].mxu0
  %174 = vmatprep.mubr.f32.mxu0 0.0
  %175 = vmatmul.mubr.f32.gmra.mrb[0].mxu0 %v71
  %v176 = vpop.f32.mrb[0].mxu0
  %v177 = vadd.f32 %v49, %v176
  %v178 = vpop.f32.mrb[0].mxu0
  %179 = vmatprep.mubr.f32.mxu0 0.0
  %180 = vmatmul.mubr.f32.gmra.mrb[0].mxu0 %v74
  %v181 = vpop.f32.mrb[0].mxu0
  %v182 = vadd.f32 %v49, %v181
  %v183 = vpop.f32.mrb[0].mxu0
  %184 = vdwg.mxu0
  %v185 = vld [vmem:[%s3] sm:$0xff]
  %v186 = vld [vmem:[%s3 + $0x8] sm:$0xff]
  %v187 = vld [vmem:[%s3 + $0x10] sm:$0xff]
  %v188 = vld [vmem:[%s3 + $0x18] sm:$0xff]
  %v189 = vld [vmem:[#allocation2] sm:$0xff]
  %v190 = vld [vmem:[#allocation3] sm:$0xff]
  %vm191 = vcmask 261120
  %v193 = vsel %vm191, %v189, 0
  %195 = vmatprep.subr.mxu0 0.0
  %196 = vmatpush1.msra.mxu0 %v185
  %197 = vmatprep.subr.mxu0 0.0
  %198 = vmatpush1.msra.mxu0 %v186
  %199 = vmatprep.subr.mxu0 0.0
  %200 = vmatpush1.msra.mxu0 %v187
  %201 = vmatprep.subr.mxu0 0.0
  %202 = vmatpush1.msra.mxu0 %v188
  %203 = vmatprep.subr.mxu0 0.0
  %204 = vmatpush1.msra.mxu0 0.0
  %205 = vmatprep.subr.mxu0 0.0
  %206 = vmatpush1.msra.mxu0 0.0
  %207 = vmatprep.subr.mxu0 0.0
  %208 = vmatpush1.msra.mxu0 0.0
  %209 = vmatprep.subr.mxu0 0.0
  %210 = vmatpush1.msra.mxu0 0.0
  %211 = vmatprep.subr.mxu0 0.0
  %212 = vmatpush1.msra.mxu0 0.0
  %213 = vmatprep.subr.mxu0 0.0
  %214 = vmatpush1.msra.mxu0 0.0
  %215 = vmatprep.subr.mxu0 0.0
  %216 = vmatpush1.msra.mxu0 0.0
  %217 = vmatprep.subr.mxu0 0.0
  %218 = vmatpush1.msra.mxu0 0.0
  %219 = vmatprep.subr.mxu0 0.0
  %220 = vmatpush1.msra.mxu0 0.0
  %221 = vmatprep.subr.mxu0 0.0
  %222 = vmatpush1.msra.mxu0 0.0
  %223 = vmatprep.subr.mxu0 0.0
  %224 = vmatpush1.msra.mxu0 0.0
  %225 = vmatprep.subr.mxu0 0.0
  %226 = vmatpush1.msra.mxu0 0.0
  %227 = vmatprep.subr.mxu0 0.0
  %228 = vmatpush1.msra.mxu0 0.0
  %229 = vmatprep.subr.mxu0 0.0
  %230 = vmatpush1.msra.mxu0 0.0
  %231 = vmatprep.subr.mxu0 0.0
  %232 = vmatpush1.msra.mxu0 0.0
  %233 = vmatprep.subr.mxu0 0.0
  %234 = vmatpush1.msra.mxu0 0.0
  %235 = vmatprep.subr.mxu0 0.0
  %236 = vmatpush1.msra.mxu0 0.0
  %237 = vmatprep.subr.mxu0 0.0
  %238 = vmatpush1.msra.mxu0 0.0
  %239 = vmatprep.subr.mxu0 0.0
  %240 = vmatpush1.msra.mxu0 0.0
  %241 = vmatprep.subr.mxu0 0.0
  %242 = vmatpush1.msra.mxu0 0.0
  %243 = vmatprep.subr.mxu0 0.0
  %244 = vmatpush1.msra.mxu0 0.0
  %245 = vmatprep.subr.mxu0 0.0
  %246 = vmatpush1.msra.mxu0 0.0
  %247 = vmatprep.subr.mxu0 0.0
  %248 = vmatpush1.msra.mxu0 0.0
  %249 = vmatprep.subr.mxu0 0.0
  %250 = vmatpush1.msra.mxu0 0.0
  %251 = vmatprep.subr.mxu0 0.0
  %252 = vmatpush1.msra.mxu0 0.0
  %253 = vmatprep.subr.mxu0 0.0
  %254 = vmatpush1.msra.mxu0 0.0
  %255 = vmatprep.subr.mxu0 0.0
  %256 = vmatpush1.msra.mxu0 0.0
  %257 = vmatprep.subr.mxu0 0.0
  %258 = vmatpush1.msra.mxu0 0.0
  %259 = vmatprep.mubr.f32.mxu0 0.0
  %260 = vmatmul.mubr.f32.gmra.mrb[0].mxu0 %v193
  %v261 = vpop.f32.mrb[0].mxu0
  %v262 = vadd.f32 0.0, %v261
  %v263 = vpop.f32.mrb[0].mxu0
  %264 = vdwg.mxu0
  %v265 = vadd.f32 %v147, %v262
  %v266 = vxor.u32 %v265, 2147483648
  %v267 = vmul.f32 %v266, 1.442695
  %v268 = vpow.pop %v267
  %v269 = vadd.f32 %v268, 1.0
  %v270 = vrcp.pop %v269
  %v271 = vmul.f32 1.0, %v270
  %v272 = vtanh.pop %v265
  %274 = vrot.lane.b32.xlu0 %v190, 32
  %v275 = vpop.permute.xlu0 %274
  %v277 = vmul.f32 %v271, %v275
  %279 = vrot.lane.b32.xlu0 %v272, 32
  %v280 = vpop.permute.xlu0 %279
  %v282 = vmul.f32 %v271, %v280
  %284 = vrot.lane.b32.xlu0 %v282, 32
  %v285 = vpop.permute.xlu0 %284
  %v287 = vadd.f32 %v277, %v285
  %v288 = vtanh.pop %v287
  %290 = vrot.lane.b32.xlu0 %v288, 32
  %v291 = vpop.permute.xlu0 %290
  %v293 = vmul.f32 %v271, %v291
  %295 = vrot.lane.b32.xlu0 %v293, 64
  %v296 = vpop.permute.xlu0 %295
  %298 = vst.msk [vmem:[#allocation4] sm:$0xff] %vm191, %v296
  %v299 = vsel %vm191, %v296, 0
  %301 = vmatprep.subr.mxu0 0.0
  %302 = vmatpush1.msra.mxu0 %v185
  %303 = vmatprep.subr.mxu0 0.0
  %304 = vmatpush1.msra.mxu0 %v186
  %305 = vmatprep.subr.mxu0 0.0
  %306 = vmatpush1.msra.mxu0 %v187
  %307 = vmatprep.subr.mxu0 0.0
  %308 = vmatpush1.msra.mxu0 %v188
  %309 = vmatprep.subr.mxu0 0.0
  %310 = vmatpush1.msra.mxu0 0.0
  %311 = vmatprep.subr.mxu0 0.0
  %312 = vmatpush1.msra.mxu0 0.0
  %313 = vmatprep.subr.mxu0 0.0
  %314 = vmatpush1.msra.mxu0 0.0
  %315 = vmatprep.subr.mxu0 0.0
  %316 = vmatpush1.msra.mxu0 0.0
  %317 = vmatprep.subr.mxu0 0.0
  %318 = vmatpush1.msra.mxu0 0.0
  %319 = vmatprep.subr.mxu0 0.0
  %320 = vmatpush1.msra.mxu0 0.0
  %321 = vmatprep.subr.mxu0 0.0
  %322 = vmatpush1.msra.mxu0 0.0
  %323 = vmatprep.subr.mxu0 0.0
  %324 = vmatpush1.msra.mxu0 0.0
  %325 = vmatprep.subr.mxu0 0.0
  %326 = vmatpush1.msra.mxu0 0.0
  %327 = vmatprep.subr.mxu0 0.0
  %328 = vmatpush1.msra.mxu0 0.0
  %329 = vmatprep.subr.mxu0 0.0
  %330 = vmatpush1.msra.mxu0 0.0
  %331 = vmatprep.subr.mxu0 0.0
  %332 = vmatpush1.msra.mxu0 0.0
  %333 = vmatprep.subr.mxu0 0.0
  %334 = vmatpush1.msra.mxu0 0.0
  %335 = vmatprep.subr.mxu0 0.0
  %336 = vmatpush1.msra.mxu0 0.0
  %337 = vmatprep.subr.mxu0 0.0
  %338 = vmatpush1.msra.mxu0 0.0
  %339 = vmatprep.subr.mxu0 0.0
  %340 = vmatpush1.msra.mxu0 0.0
  %341 = vmatprep.subr.mxu0 0.0
  %342 = vmatpush1.msra.mxu0 0.0
  %343 = vmatprep.subr.mxu0 0.0
  %344 = vmatpush1.msra.mxu0 0.0
  %345 = vmatprep.subr.mxu0 0.0
  %346 = vmatpush1.msra.mxu0 0.0
  %347 = vmatprep.subr.mxu0 0.0
  %348 = vmatpush1.msra.mxu0 0.0
  %349 = vmatprep.subr.mxu0 0.0
  %350 = vmatpush1.msra.mxu0 0.0
  %351 = vmatprep.subr.mxu0 0.0
  %352 = vmatpush1.msra.mxu0 0.0
  %353 = vmatprep.subr.mxu0 0.0
  %354 = vmatpush1.msra.mxu0 0.0
  %355 = vmatprep.subr.mxu0 0.0
  %356 = vmatpush1.msra.mxu0 0.0
  %357 = vmatprep.subr.mxu0 0.0
  %358 = vmatpush1.msra.mxu0 0.0
  %359 = vmatprep.subr.mxu0 0.0
  %360 = vmatpush1.msra.mxu0 0.0
  %361 = vmatprep.subr.mxu0 0.0
  %362 = vmatpush1.msra.mxu0 0.0
  %363 = vmatprep.subr.mxu0 0.0
  %364 = vmatpush1.msra.mxu0 0.0
  %365 = vmatprep.mubr.f32.mxu0 0.0
  %366 = vmatmul.mubr.f32.gmra.mrb[0].mxu0 %v299
  %v367 = vpop.f32.mrb[0].mxu0
  %v368 = vadd.f32 0.0, %v367
  %v369 = vpop.f32.mrb[0].mxu0
  %370 = vdwg.mxu0
  %v371 = vadd.f32 %v152, %v368
  %v372 = vxor.u32 %v371, 2147483648
  %v373 = vmul.f32 %v372, 1.442695
  %v374 = vpow.pop %v373
  %v375 = vadd.f32 %v374, 1.0
  %v376 = vrcp.pop %v375
  %v377 = vmul.f32 1.0, %v376
  %v378 = vtanh.pop %v371
  %v379 = vmul.f32 %v377, %v287
  %381 = vrot.lane.b32.xlu0 %v378, 32
  %v382 = vpop.permute.xlu0 %381
  %v384 = vmul.f32 %v377, %v382
  %386 = vrot.lane.b32.xlu0 %v384, 32
  %v387 = vpop.permute.xlu0 %386
  %v389 = vadd.f32 %v379, %v387
  %v390 = vtanh.pop %v389
  %392 = vrot.lane.b32.xlu0 %v390, 32
  %v393 = vpop.permute.xlu0 %392
  %v395 = vmul.f32 %v377, %v393
  %397 = vrot.lane.b32.xlu0 %v395, 64
  %v398 = vpop.permute.xlu0 %397
  %400 = vst.msk [vmem:[#allocation4 + $0x8] sm:$0xff] %vm191, %v398
  %v401 = vsel %vm191, %v398, 0
  %403 = vmatprep.subr.mxu0 0.0
  %404 = vmatpush1.msra.mxu0 %v185
  %405 = vmatprep.subr.mxu0 0.0
  %406 = vmatpush1.msra.mxu0 %v186
  %407 = vmatprep.subr.mxu0 0.0
  %408 = vmatpush1.msra.mxu0 %v187
  %409 = vmatprep.subr.mxu0 0.0
  %410 = vmatpush1.msra.mxu0 %v188
  %411 = vmatprep.subr.mxu0 0.0
  %412 = vmatpush1.msra.mxu0 0.0
  %413 = vmatprep.subr.mxu0 0.0
  %414 = vmatpush1.msra.mxu0 0.0
  %415 = vmatprep.subr.mxu0 0.0
  %416 = vmatpush1.msra.mxu0 0.0
  %417 = vmatprep.subr.mxu0 0.0
  %418 = vmatpush1.msra.mxu0 0.0
  %419 = vmatprep.subr.mxu0 0.0
  %420 = vmatpush1.msra.mxu0 0.0
  %421 = vmatprep.subr.mxu0 0.0
  %422 = vmatpush1.msra.mxu0 0.0
  %423 = vmatprep.subr.mxu0 0.0
  %424 = vmatpush1.msra.mxu0 0.0
  %425 = vmatprep.subr.mxu0 0.0
  %426 = vmatpush1.msra.mxu0 0.0
  %427 = vmatprep.subr.mxu0 0.0
  %428 = vmatpush1.msra.mxu0 0.0
  %429 = vmatprep.subr.mxu0 0.0
  %430 = vmatpush1.msra.mxu0 0.0
  %431 = vmatprep.subr.mxu0 0.0
  %432 = vmatpush1.msra.mxu0 0.0
  %433 = vmatprep.subr.mxu0 0.0
  %434 = vmatpush1.msra.mxu0 0.0
  %435 = vmatprep.subr.mxu0 0.0
  %436 = vmatpush1.msra.mxu0 0.0
  %437 = vmatprep.subr.mxu0 0.0
  %438 = vmatpush1.msra.mxu0 0.0
  %439 = vmatprep.subr.mxu0 0.0
  %440 = vmatpush1.msra.mxu0 0.0
  %441 = vmatprep.subr.mxu0 0.0
  %442 = vmatpush1.msra.mxu0 0.0
  %443 = vmatprep.subr.mxu0 0.0
  %444 = vmatpush1.msra.mxu0 0.0
  %445 = vmatprep.subr.mxu0 0.0
  %446 = vmatpush1.msra.mxu0 0.0
  %447 = vmatprep.subr.mxu0 0.0
  %448 = vmatpush1.msra.mxu0 0.0
  %449 = vmatprep.subr.mxu0 0.0
  %450 = vmatpush1.msra.mxu0 0.0
  %451 = vmatprep.subr.mxu0 0.0
  %452 = vmatpush1.msra.mxu0 0.0
  %453 = vmatprep.subr.mxu0 0.0
  %454 = vmatpush1.msra.mxu0 0.0
  %455 = vmatprep.subr.mxu0 0.0
  %456 = vmatpush1.msra.mxu0 0.0
  %457 = vmatprep.subr.mxu0 0.0
  %458 = vmatpush1.msra.mxu0 0.0
  %459 = vmatprep.subr.mxu0 0.0
  %460 = vmatpush1.msra.mxu0 0.0
  %461 = vmatprep.subr.mxu0 0.0
  %462 = vmatpush1.msra.mxu0 0.0
  %463 = vmatprep.subr.mxu0 0.0
  %464 = vmatpush1.msra.mxu0 0.0
  %465 = vmatprep.subr.mxu0 0.0
  %466 = vmatpush1.msra.mxu0 0.0
  %467 = vmatprep.mubr.f32.mxu0 0.0
  %468 = vmatmul.mubr.f32.gmra.mrb[0].mxu0 %v401
  %v469 = vpop.f32.mrb[0].mxu0
  %v470 = vadd.f32 0.0, %v469
  %v471 = vpop.f32.mrb[0].mxu0
  %472 = vdwg.mxu0
  %v473 = vadd.f32 %v157, %v470
  %v474 = vxor.u32 %v473, 2147483648
  %v475 = vmul.f32 %v474, 1.442695
  %v476 = vpow.pop %v475
  %v477 = vadd.f32 %v476, 1.0
  %v478 = vrcp.pop %v477
  %v479 = vmul.f32 1.0, %v478
  %v480 = vtanh.pop %v473
  %v481 = vmul.f32 %v479, %v389
  %483 = vrot.lane.b32.xlu0 %v480, 32
  %v484 = vpop.permute.xlu0 %483
  %v486 = vmul.f32 %v479, %v484
  %488 = vrot.lane.b32.xlu0 %v486, 32
  %v489 = vpop.permute.xlu0 %488
  %v491 = vadd.f32 %v481, %v489
  %v492 = vtanh.pop %v491
  %494 = vrot.lane.b32.xlu0 %v492, 32
  %v495 = vpop.permute.xlu0 %494
  %v497 = vmul.f32 %v479, %v495
  %499 = vrot.lane.b32.xlu0 %v497, 64
  %v500 = vpop.permute.xlu0 %499
  %502 = vst.msk [vmem:[#allocation4 + $0x10] sm:$0xff] %vm191, %v500
  %v503 = vsel %vm191, %v500, 0
  %505 = vmatprep.subr.mxu0 0.0
  %506 = vmatpush1.msra.mxu0 %v185
  %507 = vmatprep.subr.mxu0 0.0
  %508 = vmatpush1.msra.mxu0 %v186
  %509 = vmatprep.subr.mxu0 0.0
  %510 = vmatpush1.msra.mxu0 %v187
  %511 = vmatprep.subr.mxu0 0.0
  %512 = vmatpush1.msra.mxu0 %v188
  %513 = vmatprep.subr.mxu0 0.0
  %514 = vmatpush1.msra.mxu0 0.0
  %515 = vmatprep.subr.mxu0 0.0
  %516 = vmatpush1.msra.mxu0 0.0
  %517 = vmatprep.subr.mxu0 0.0
  %518 = vmatpush1.msra.mxu0 0.0
  %519 = vmatprep.subr.mxu0 0.0
  %520 = vmatpush1.msra.mxu0 0.0
  %521 = vmatprep.subr.mxu0 0.0
  %522 = vmatpush1.msra.mxu0 0.0
  %523 = vmatprep.subr.mxu0 0.0
  %524 = vmatpush1.msra.mxu0 0.0
  %525 = vmatprep.subr.mxu0 0.0
  %526 = vmatpush1.msra.mxu0 0.0
  %527 = vmatprep.subr.mxu0 0.0
  %528 = vmatpush1.msra.mxu0 0.0
  %529 = vmatprep.subr.mxu0 0.0
  %530 = vmatpush1.msra.mxu0 0.0
  %531 = vmatprep.subr.mxu0 0.0
  %532 = vmatpush1.msra.mxu0 0.0
  %533 = vmatprep.subr.mxu0 0.0
  %534 = vmatpush1.msra.mxu0 0.0
  %535 = vmatprep.subr.mxu0 0.0
  %536 = vmatpush1.msra.mxu0 0.0
  %537 = vmatprep.subr.mxu0 0.0
  %538 = vmatpush1.msra.mxu0 0.0
  %539 = vmatprep.subr.mxu0 0.0
  %540 = vmatpush1.msra.mxu0 0.0
  %541 = vmatprep.subr.mxu0 0.0
  %542 = vmatpush1.msra.mxu0 0.0
  %543 = vmatprep.subr.mxu0 0.0
  %544 = vmatpush1.msra.mxu0 0.0
  %545 = vmatprep.subr.mxu0 0.0
  %546 = vmatpush1.msra.mxu0 0.0
  %547 = vmatprep.subr.mxu0 0.0
  %548 = vmatpush1.msra.mxu0 0.0
  %549 = vmatprep.subr.mxu0 0.0
  %550 = vmatpush1.msra.mxu0 0.0
  %551 = vmatprep.subr.mxu0 0.0
  %552 = vmatpush1.msra.mxu0 0.0
  %553 = vmatprep.subr.mxu0 0.0
  %554 = vmatpush1.msra.mxu0 0.0
  %555 = vmatprep.subr.mxu0 0.0
  %556 = vmatpush1.msra.mxu0 0.0
  %557 = vmatprep.subr.mxu0 0.0
  %558 = vmatpush1.msra.mxu0 0.0
  %559 = vmatprep.subr.mxu0 0.0
  %560 = vmatpush1.msra.mxu0 0.0
  %561 = vmatprep.subr.mxu0 0.0
  %562 = vmatpush1.msra.mxu0 0.0
  %563 = vmatprep.subr.mxu0 0.0
  %564 = vmatpush1.msra.mxu0 0.0
  %565 = vmatprep.subr.mxu0 0.0
  %566 = vmatpush1.msra.mxu0 0.0
  %567 = vmatprep.subr.mxu0 0.0
  %568 = vmatpush1.msra.mxu0 0.0
  %569 = vmatprep.mubr.f32.mxu0 0.0
  %570 = vmatmul.mubr.f32.gmra.mrb[0].mxu0 %v503
  %v571 = vpop.f32.mrb[0].mxu0
  %v572 = vadd.f32 0.0, %v571
  %v573 = vpop.f32.mrb[0].mxu0
  %574 = vdwg.mxu0
  %v575 = vadd.f32 %v162, %v572
  %v576 = vxor.u32 %v575, 2147483648
  %v577 = vmul.f32 %v576, 1.442695
  %v578 = vpow.pop %v577
  %v579 = vadd.f32 %v578, 1.0
  %v580 = vrcp.pop %v579
  %v581 = vmul.f32 1.0, %v580
  %v582 = vtanh.pop %v575
  %v583 = vmul.f32 %v581, %v491
  %585 = vrot.lane.b32.xlu0 %v582, 32
  %v586 = vpop.permute.xlu0 %585
  %v588 = vmul.f32 %v581, %v586
  %590 = vrot.lane.b32.xlu0 %v588, 32
  %v591 = vpop.permute.xlu0 %590
  %v593 = vadd.f32 %v583, %v591
  %v594 = vtanh.pop %v593
  %596 = vrot.lane.b32.xlu0 %v594, 32
  %v597 = vpop.permute.xlu0 %596
  %v599 = vmul.f32 %v581, %v597
  %601 = vrot.lane.b32.xlu0 %v599, 64
  %v602 = vpop.permute.xlu0 %601
  %604 = vst.msk [vmem:[#allocation4 + $0x18] sm:$0xff] %vm191, %v602
  %v605 = vsel %vm191, %v602, 0
  %607 = vmatprep.subr.mxu0 0.0
  %608 = vmatpush1.msra.mxu0 %v185
  %609 = vmatprep.subr.mxu0 0.0
  %610 = vmatpush1.msra.mxu0 %v186
  %611 = vmatprep.subr.mxu0 0.0
  %612 = vmatpush1.msra.mxu0 %v187
  %613 = vmatprep.subr.mxu0 0.0
  %614 = vmatpush1.msra.mxu0 %v188
  %615 = vmatprep.subr.mxu0 0.0
  %616 = vmatpush1.msra.mxu0 0.0
  %617 = vmatprep.subr.mxu0 0.0
  %618 = vmatpush1.msra.mxu0 0.0
  %619 = vmatprep.subr.mxu0 0.0
  %620 = vmatpush1.msra.mxu0 0.0
  %621 = vmatprep.subr.mxu0 0.0
  %622 = vmatpush1.msra.mxu0 0.0
  %623 = vmatprep.subr.mxu0 0.0
  %624 = vmatpush1.msra.mxu0 0.0
  %625 = vmatprep.subr.mxu0 0.0
  %626 = vmatpush1.msra.mxu0 0.0
  %627 = vmatprep.subr.mxu0 0.0
  %628 = vmatpush1.msra.mxu0 0.0
  %629 = vmatprep.subr.mxu0 0.0
  %630 = vmatpush1.msra.mxu0 0.0
  %631 = vmatprep.subr.mxu0 0.0
  %632 = vmatpush1.msra.mxu0 0.0
  %633 = vmatprep.subr.mxu0 0.0
  %634 = vmatpush1.msra.mxu0 0.0
  %635 = vmatprep.subr.mxu0 0.0
  %636 = vmatpush1.msra.mxu0 0.0
  %637 = vmatprep.subr.mxu0 0.0
  %638 = vmatpush1.msra.mxu0 0.0
  %639 = vmatprep.subr.mxu0 0.0
  %640 = vmatpush1.msra.mxu0 0.0
  %641 = vmatprep.subr.mxu0 0.0
  %642 = vmatpush1.msra.mxu0 0.0
  %643 = vmatprep.subr.mxu0 0.0
  %644 = vmatpush1.msra.mxu0 0.0
  %645 = vmatprep.subr.mxu0 0.0
  %646 = vmatpush1.msra.mxu0 0.0
  %647 = vmatprep.subr.mxu0 0.0
  %648 = vmatpush1.msra.mxu0 0.0
  %649 = vmatprep.subr.mxu0 0.0
  %650 = vmatpush1.msra.mxu0 0.0
  %651 = vmatprep.subr.mxu0 0.0
  %652 = vmatpush1.msra.mxu0 0.0
  %653 = vmatprep.subr.mxu0 0.0
  %654 = vmatpush1.msra.mxu0 0.0
  %655 = vmatprep.subr.mxu0 0.0
  %656 = vmatpush1.msra.mxu0 0.0
  %657 = vmatprep.subr.mxu0 0.0
  %658 = vmatpush1.msra.mxu0 0.0
  %659 = vmatprep.subr.mxu0 0.0
  %660 = vmatpush1.msra.mxu0 0.0
  %661 = vmatprep.subr.mxu0 0.0
  %662 = vmatpush1.msra.mxu0 0.0
  %663 = vmatprep.subr.mxu0 0.0
  %664 = vmatpush1.msra.mxu0 0.0
  %665 = vmatprep.subr.mxu0 0.0
  %666 = vmatpush1.msra.mxu0 0.0
  %667 = vmatprep.subr.mxu0 0.0
  %668 = vmatpush1.msra.mxu0 0.0
  %669 = vmatprep.subr.mxu0 0.0
  %670 = vmatpush1.msra.mxu0 0.0
  %671 = vmatprep.mubr.f32.mxu0 0.0
  %672 = vmatmul.mubr.f32.gmra.mrb[0].mxu0 %v605
  %v673 = vpop.f32.mrb[0].mxu0
  %v674 = vadd.f32 0.0, %v673
  %v675 = vpop.f32.mrb[0].mxu0
  %676 = vdwg.mxu0
  %v677 = vadd.f32 %v167, %v674
  %v678 = vxor.u32 %v677, 2147483648
  %v679 = vmul.f32 %v678, 1.442695
  %v680 = vpow.pop %v679
  %v681 = vadd.f32 %v680, 1.0
  %v682 = vrcp.pop %v681
  %v683 = vmul.f32 1.0, %v682
  %v684 = vtanh.pop %v677
  %v685 = vmul.f32 %v683, %v593
  %687 = vrot.lane.b32.xlu0 %v684, 32
  %v688 = vpop.permute.xlu0 %687
  %v690 = vmul.f32 %v683, %v688
  %692 = vrot.lane.b32.xlu0 %v690, 32
  %v693 = vpop.permute.xlu0 %692
  %v695 = vadd.f32 %v685, %v693
  %v696 = vtanh.pop %v695
  %698 = vrot.lane.b32.xlu0 %v696, 32
  %v699 = vpop.permute.xlu0 %698
  %v701 = vmul.f32 %v683, %v699
  %703 = vrot.lane.b32.xlu0 %v701, 64
  %v704 = vpop.permute.xlu0 %703
  %706 = vst.msk [vmem:[#allocation4 + $0x20] sm:$0xff] %vm191, %v704
  %v707 = vsel %vm191, %v704, 0
  %709 = vmatprep.subr.mxu0 0.0
  %710 = vmatpush1.msra.mxu0 %v185
  %711 = vmatprep.subr.mxu0 0.0
  %712 = vmatpush1.msra.mxu0 %v186
  %713 = vmatprep.subr.mxu0 0.0
  %714 = vmatpush1.msra.mxu0 %v187
  %715 = vmatprep.subr.mxu0 0.0
  %716 = vmatpush1.msra.mxu0 %v188
  %717 = vmatprep.subr.mxu0 0.0
  %718 = vmatpush1.msra.mxu0 0.0
  %719 = vmatprep.subr.mxu0 0.0
  %720 = vmatpush1.msra.mxu0 0.0
  %721 = vmatprep.subr.mxu0 0.0
  %722 = vmatpush1.msra.mxu0 0.0
  %723 = vmatprep.subr.mxu0 0.0
  %724 = vmatpush1.msra.mxu0 0.0
  %725 = vmatprep.subr.mxu0 0.0
  %726 = vmatpush1.msra.mxu0 0.0
  %727 = vmatprep.subr.mxu0 0.0
  %728 = vmatpush1.msra.mxu0 0.0
  %729 = vmatprep.subr.mxu0 0.0
  %730 = vmatpush1.msra.mxu0 0.0
  %731 = vmatprep.subr.mxu0 0.0
  %732 = vmatpush1.msra.mxu0 0.0
  %733 = vmatprep.subr.mxu0 0.0
  %734 = vmatpush1.msra.mxu0 0.0
  %735 = vmatprep.subr.mxu0 0.0
  %736 = vmatpush1.msra.mxu0 0.0
  %737 = vmatprep.subr.mxu0 0.0
  %738 = vmatpush1.msra.mxu0 0.0
  %739 = vmatprep.subr.mxu0 0.0
  %740 = vmatpush1.msra.mxu0 0.0
  %741 = vmatprep.subr.mxu0 0.0
  %742 = vmatpush1.msra.mxu0 0.0
  %743 = vmatprep.subr.mxu0 0.0
  %744 = vmatpush1.msra.mxu0 0.0
  %745 = vmatprep.subr.mxu0 0.0
  %746 = vmatpush1.msra.mxu0 0.0
  %747 = vmatprep.subr.mxu0 0.0
  %748 = vmatpush1.msra.mxu0 0.0
  %749 = vmatprep.subr.mxu0 0.0
  %750 = vmatpush1.msra.mxu0 0.0
  %751 = vmatprep.subr.mxu0 0.0
  %752 = vmatpush1.msra.mxu0 0.0
  %753 = vmatprep.subr.mxu0 0.0
  %754 = vmatpush1.msra.mxu0 0.0
  %755 = vmatprep.subr.mxu0 0.0
  %756 = vmatpush1.msra.mxu0 0.0
  %757 = vmatprep.subr.mxu0 0.0
  %758 = vmatpush1.msra.mxu0 0.0
  %759 = vmatprep.subr.mxu0 0.0
  %760 = vmatpush1.msra.mxu0 0.0
  %761 = vmatprep.subr.mxu0 0.0
  %762 = vmatpush1.msra.mxu0 0.0
  %763 = vmatprep.subr.mxu0 0.0
  %764 = vmatpush1.msra.mxu0 0.0
  %765 = vmatprep.subr.mxu0 0.0
  %766 = vmatpush1.msra.mxu0 0.0
  %767 = vmatprep.subr.mxu0 0.0
  %768 = vmatpush1.msra.mxu0 0.0
  %769 = vmatprep.subr.mxu0 0.0
  %770 = vmatpush1.msra.mxu0 0.0
  %771 = vmatprep.subr.mxu0 0.0
  %772 = vmatpush1.msra.mxu0 0.0
  %773 = vmatprep.mubr.f32.mxu0 0.0
  %774 = vmatmul.mubr.f32.gmra.mrb[0].mxu0 %v707
  %v775 = vpop.f32.mrb[0].mxu0
  %v776 = vadd.f32 0.0, %v775
  %v777 = vpop.f32.mrb[0].mxu0
  %778 = vdwg.mxu0
  %v779 = vadd.f32 %v172, %v776
  %v780 = vxor.u32 %v779, 2147483648
  %v781 = vmul.f32 %v780, 1.442695
  %v782 = vpow.pop %v781
  %v783 = vadd.f32 %v782, 1.0
  %v784 = vrcp.pop %v783
  %v785 = vmul.f32 1.0, %v784
  %v786 = vtanh.pop %v779
  %v787 = vmul.f32 %v785, %v695
  %789 = vrot.lane.b32.xlu0 %v786, 32
  %v790 = vpop.permute.xlu0 %789
  %v792 = vmul.f32 %v785, %v790
  %794 = vrot.lane.b32.xlu0 %v792, 32
  %v795 = vpop.permute.xlu0 %794
  %v797 = vadd.f32 %v787, %v795
  %v798 = vtanh.pop %v797
  %800 = vrot.lane.b32.xlu0 %v798, 32
  %v801 = vpop.permute.xlu0 %800
  %v803 = vmul.f32 %v785, %v801
  %805 = vrot.lane.b32.xlu0 %v803, 64
  %v806 = vpop.permute.xlu0 %805
  %808 = vst.msk [vmem:[#allocation4 + $0x28] sm:$0xff] %vm191, %v806
  %v809 = vsel %vm191, %v806, 0
  %811 = vmatprep.subr.mxu0 0.0
  %812 = vmatpush1.msra.mxu0 %v185
  %813 = vmatprep.subr.mxu0 0.0
  %814 = vmatpush1.msra.mxu0 %v186
  %815 = vmatprep.subr.mxu0 0.0
  %816 = vmatpush1.msra.mxu0 %v187
  %817 = vmatprep.subr.mxu0 0.0
  %818 = vmatpush1.msra.mxu0 %v188
  %819 = vmatprep.subr.mxu0 0.0
  %820 = vmatpush1.msra.mxu0 0.0
  %821 = vmatprep.subr.mxu0 0.0
  %822 = vmatpush1.msra.mxu0 0.0
  %823 = vmatprep.subr.mxu0 0.0
  %824 = vmatpush1.msra.mxu0 0.0
  %825 = vmatprep.subr.mxu0 0.0
  %826 = vmatpush1.msra.mxu0 0.0
  %827 = vmatprep.subr.mxu0 0.0
  %828 = vmatpush1.msra.mxu0 0.0
  %829 = vmatprep.subr.mxu0 0.0
  %830 = vmatpush1.msra.mxu0 0.0
  %831 = vmatprep.subr.mxu0 0.0
  %832 = vmatpush1.msra.mxu0 0.0
  %833 = vmatprep.subr.mxu0 0.0
  %834 = vmatpush1.msra.mxu0 0.0
  %835 = vmatprep.subr.mxu0 0.0
  %836 = vmatpush1.msra.mxu0 0.0
  %837 = vmatprep.subr.mxu0 0.0
  %838 = vmatpush1.msra.mxu0 0.0
  %839 = vmatprep.subr.mxu0 0.0
  %840 = vmatpush1.msra.mxu0 0.0
  %841 = vmatprep.subr.mxu0 0.0
  %842 = vmatpush1.msra.mxu0 0.0
  %843 = vmatprep.subr.mxu0 0.0
  %844 = vmatpush1.msra.mxu0 0.0
  %845 = vmatprep.subr.mxu0 0.0
  %846 = vmatpush1.msra.mxu0 0.0
  %847 = vmatprep.subr.mxu0 0.0
  %848 = vmatpush1.msra.mxu0 0.0
  %849 = vmatprep.subr.mxu0 0.0
  %850 = vmatpush1.msra.mxu0 0.0
  %851 = vmatprep.subr.mxu0 0.0
  %852 = vmatpush1.msra.mxu0 0.0
  %853 = vmatprep.subr.mxu0 0.0
  %854 = vmatpush1.msra.mxu0 0.0
  %855 = vmatprep.subr.mxu0 0.0
  %856 = vmatpush1.msra.mxu0 0.0
  %857 = vmatprep.subr.mxu0 0.0
  %858 = vmatpush1.msra.mxu0 0.0
  %859 = vmatprep.subr.mxu0 0.0
  %860 = vmatpush1.msra.mxu0 0.0
  %861 = vmatprep.subr.mxu0 0.0
  %862 = vmatpush1.msra.mxu0 0.0
  %863 = vmatprep.subr.mxu0 0.0
  %864 = vmatpush1.msra.mxu0 0.0
  %865 = vmatprep.subr.mxu0 0.0
  %866 = vmatpush1.msra.mxu0 0.0
  %867 = vmatprep.subr.mxu0 0.0
  %868 = vmatpush1.msra.mxu0 0.0
  %869 = vmatprep.subr.mxu0 0.0
  %870 = vmatpush1.msra.mxu0 0.0
  %871 = vmatprep.subr.mxu0 0.0
  %872 = vmatpush1.msra.mxu0 0.0
  %873 = vmatprep.subr.mxu0 0.0
  %874 = vmatpush1.msra.mxu0 0.0
  %875 = vmatprep.mubr.f32.mxu0 0.0
  %876 = vmatmul.mubr.f32.gmra.mrb[0].mxu0 %v809
  %v877 = vpop.f32.mrb[0].mxu0
  %v878 = vadd.f32 0.0, %v877
  %v879 = vpop.f32.mrb[0].mxu0
  %880 = vdwg.mxu0
  %v881 = vadd.f32 %v177, %v878
  %v882 = vxor.u32 %v881, 2147483648
  %v883 = vmul.f32 %v882, 1.442695
  %v884 = vpow.pop %v883
  %v885 = vadd.f32 %v884, 1.0
  %v886 = vrcp.pop %v885
  %v887 = vmul.f32 1.0, %v886
  %v888 = vtanh.pop %v881
  %v889 = vmul.f32 %v887, %v797
  %891 = vrot.lane.b32.xlu0 %v888, 32
  %v892 = vpop.permute.xlu0 %891
  %v894 = vmul.f32 %v887, %v892
  %896 = vrot.lane.b32.xlu0 %v894, 32
  %v897 = vpop.permute.xlu0 %896
  %v899 = vadd.f32 %v889, %v897
  %v900 = vtanh.pop %v899
  %902 = vrot.lane.b32.xlu0 %v900, 32
  %v903 = vpop.permute.xlu0 %902
  %v905 = vmul.f32 %v887, %v903
  %907 = vrot.lane.b32.xlu0 %v905, 64
  %v908 = vpop.permute.xlu0 %907
  %910 = vst.msk [vmem:[#allocation4 + $0x30] sm:$0xff] %vm191, %v908
  %v911 = vsel %vm191, %v908, 0
  %913 = vmatprep.subr.mxu0 0.0
  %914 = vmatpush1.msra.mxu0 %v185
  %915 = vmatprep.subr.mxu0 0.0
  %916 = vmatpush1.msra.mxu0 %v186
  %917 = vmatprep.subr.mxu0 0.0
  %918 = vmatpush1.msra.mxu0 %v187
  %919 = vmatprep.subr.mxu0 0.0
  %920 = vmatpush1.msra.mxu0 %v188
  %921 = vmatprep.subr.mxu0 0.0
  %922 = vmatpush1.msra.mxu0 0.0
  %923 = vmatprep.subr.mxu0 0.0
  %924 = vmatpush1.msra.mxu0 0.0
  %925 = vmatprep.subr.mxu0 0.0
  %926 = vmatpush1.msra.mxu0 0.0
  %927 = vmatprep.subr.mxu0 0.0
  %928 = vmatpush1.msra.mxu0 0.0
  %929 = vmatprep.subr.mxu0 0.0
  %930 = vmatpush1.msra.mxu0 0.0
  %931 = vmatprep.subr.mxu0 0.0
  %932 = vmatpush1.msra.mxu0 0.0
  %933 = vmatprep.subr.mxu0 0.0
  %934 = vmatpush1.msra.mxu0 0.0
  %935 = vmatprep.subr.mxu0 0.0
  %936 = vmatpush1.msra.mxu0 0.0
  %937 = vmatprep.subr.mxu0 0.0
  %938 = vmatpush1.msra.mxu0 0.0
  %939 = vmatprep.subr.mxu0 0.0
  %940 = vmatpush1.msra.mxu0 0.0
  %941 = vmatprep.subr.mxu0 0.0
  %942 = vmatpush1.msra.mxu0 0.0
  %943 = vmatprep.subr.mxu0 0.0
  %944 = vmatpush1.msra.mxu0 0.0
  %945 = vmatprep.subr.mxu0 0.0
  %946 = vmatpush1.msra.mxu0 0.0
  %947 = vmatprep.subr.mxu0 0.0
  %948 = vmatpush1.msra.mxu0 0.0
  %949 = vmatprep.subr.mxu0 0.0
  %950 = vmatpush1.msra.mxu0 0.0
  %951 = vmatprep.subr.mxu0 0.0
  %952 = vmatpush1.msra.mxu0 0.0
  %953 = vmatprep.subr.mxu0 0.0
  %954 = vmatpush1.msra.mxu0 0.0
  %955 = vmatprep.subr.mxu0 0.0
  %956 = vmatpush1.msra.mxu0 0.0
  %957 = vmatprep.subr.mxu0 0.0
  %958 = vmatpush1.msra.mxu0 0.0
  %959 = vmatprep.subr.mxu0 0.0
  %960 = vmatpush1.msra.mxu0 0.0
  %961 = vmatprep.subr.mxu0 0.0
  %962 = vmatpush1.msra.mxu0 0.0
  %963 = vmatprep.subr.mxu0 0.0
  %964 = vmatpush1.msra.mxu0 0.0
  %965 = vmatprep.subr.mxu0 0.0
  %966 = vmatpush1.msra.mxu0 0.0
  %967 = vmatprep.subr.mxu0 0.0
  %968 = vmatpush1.msra.mxu0 0.0
  %969 = vmatprep.subr.mxu0 0.0
  %970 = vmatpush1.msra.mxu0 0.0
  %971 = vmatprep.subr.mxu0 0.0
  %972 = vmatpush1.msra.mxu0 0.0
  %973 = vmatprep.subr.mxu0 0.0
  %974 = vmatpush1.msra.mxu0 0.0
  %975 = vmatprep.subr.mxu0 0.0
  %976 = vmatpush1.msra.mxu0 0.0
  %977 = vmatprep.mubr.f32.mxu0 0.0
  %978 = vmatmul.mubr.f32.gmra.mrb[0].mxu0 %v911
  %v979 = vpop.f32.mrb[0].mxu0
  %v980 = vadd.f32 0.0, %v979
  %v981 = vpop.f32.mrb[0].mxu0
  %982 = vdwg.mxu0
  %v983 = vadd.f32 %v182, %v980
  %v984 = vxor.u32 %v983, 2147483648
  %v985 = vmul.f32 %v984, 1.442695
  %v986 = vpow.pop %v985
  %v987 = vadd.f32 %v986, 1.0
  %v988 = vrcp.pop %v987
  %v989 = vmul.f32 1.0, %v988
  %v990 = vtanh.pop %v983
  %v991 = vmul.f32 %v989, %v899
  %993 = vrot.lane.b32.xlu0 %v990, 32
  %v994 = vpop.permute.xlu0 %993
  %v996 = vmul.f32 %v989, %v994
  %998 = vrot.lane.b32.xlu0 %v996, 32
  %v999 = vpop.permute.xlu0 %998
  %v1001 = vadd.f32 %v991, %v999
  %v1002 = vtanh.pop %v1001
  %1004 = vrot.lane.b32.xlu0 %v1002, 32
  %v1005 = vpop.permute.xlu0 %1004
  %v1007 = vmul.f32 %v989, %v1005
  %1009 = vrot.lane.b32.xlu0 %v1007, 64
  %v1010 = vpop.permute.xlu0 %1009
  %1012 = vst.msk [vmem:[#allocation4 + $0x38] sm:$0xff] %vm191, %v1010
  %1013 = vst.msk [vmem:[#allocation2] sm:$0xff] %vm191, %v1010
  %1015 = vrot.lane.b32.xlu0 %v1001, 96
  %v1016 = vpop.permute.xlu0 %1015
  %1018 = vst.msk [vmem:[#allocation3] sm:$0xff] %vm191, %v1016
  %v1019 = vld [vmem:[#allocation4] sm:$0xff]
  %v1020 = vld [vmem:[#allocation4 + $0x8] sm:$0xff]
  %v1021 = vld [vmem:[#allocation4 + $0x10] sm:$0xff]
  %v1022 = vld [vmem:[#allocation4 + $0x18] sm:$0xff]
  %v1023 = vld [vmem:[#allocation4 + $0x20] sm:$0xff]
  %v1024 = vld [vmem:[#allocation4 + $0x28] sm:$0xff]
  %v1025 = vld [vmem:[#allocation4 + $0x30] sm:$0xff]
  %v1026 = vld [vmem:[#allocation4 + $0x38] sm:$0xff]
  %v1027 = vld [vmem:[%s2] sm:$0xff]
  %v1028 = vld [vmem:[%s2 + $0x8] sm:$0xff]
  %v1029 = vld [vmem:[%s2 + $0x10] sm:$0xff]
  %v1030 = vld [vmem:[%s2 + $0x18] sm:$0xff]
  %s1031 = scalar_lea.vmem %s4, 1
  %v1032 = vld [vmem:[%s1031] sm:$0x1]
  %v1034 = vlaneseq
  %v1035 = vshrl.u32 %v1034, 7
  %v1036 = vsub.s32 0, %v1035
  %v1037 = vrot.slane %v1032, %v1036
  %v1040 = vsel %vm191, %v1019, 0
  %v1043 = vsel %vm191, %v1020, 0
  %v1046 = vsel %vm191, %v1021, 0
  %v1049 = vsel %vm191, %v1022, 0
  %v1052 = vsel %vm191, %v1023, 0
  %v1055 = vsel %vm191, %v1024, 0
  %v1058 = vsel %vm191, %v1025, 0
  %v1061 = vsel %vm191, %v1026, 0
  %1063 = vmatprep.subr.mxu0 0.0
  %1064 = vmatpush1.msra.mxu0 %v1027
  %1065 = vmatprep.subr.mxu0 0.0
  %1066 = vmatpush1.msra.mxu0 %v1028
  %1067 = vmatprep.subr.mxu0 0.0
  %1068 = vmatpush1.msra.mxu0 %v1029
  %1069 = vmatprep.subr.mxu0 0.0
  %1070 = vmatpush1.msra.mxu0 %v1030
  %1071 = vmatprep.subr.mxu0 0.0
  %1072 = vmatpush1.msra.mxu0 0.0
  %1073 = vmatprep.subr.mxu0 0.0
  %1074 = vmatpush1.msra.mxu0 0.0
  %1075 = vmatprep.subr.mxu0 0.0
  %1076 = vmatpush1.msra.mxu0 0.0
  %1077 = vmatprep.subr.mxu0 0.0
  %1078 = vmatpush1.msra.mxu0 0.0
  %1079 = vmatprep.subr.mxu0 0.0
  %1080 = vmatpush1.msra.mxu0 0.0
  %1081 = vmatprep.subr.mxu0 0.0
  %1082 = vmatpush1.msra.mxu0 0.0
  %1083 = vmatprep.subr.mxu0 0.0
  %1084 = vmatpush1.msra.mxu0 0.0
  %1085 = vmatprep.subr.mxu0 0.0
  %1086 = vmatpush1.msra.mxu0 0.0
  %1087 = vmatprep.subr.mxu0 0.0
  %1088 = vmatpush1.msra.mxu0 0.0
  %1089 = vmatprep.subr.mxu0 0.0
  %1090 = vmatpush1.msra.mxu0 0.0
  %1091 = vmatprep.subr.mxu0 0.0
  %1092 = vmatpush1.msra.mxu0 0.0
  %1093 = vmatprep.subr.mxu0 0.0
  %1094 = vmatpush1.msra.mxu0 0.0
  %1095 = vmatprep.subr.mxu0 0.0
  %1096 = vmatpush1.msra.mxu0 0.0
  %1097 = vmatprep.subr.mxu0 0.0
  %1098 = vmatpush1.msra.mxu0 0.0
  %1099 = vmatprep.subr.mxu0 0.0
  %1100 = vmatpush1.msra.mxu0 0.0
  %1101 = vmatprep.subr.mxu0 0.0
  %1102 = vmatpush1.msra.mxu0 0.0
  %1103 = vmatprep.subr.mxu0 0.0
  %1104 = vmatpush1.msra.mxu0 0.0
  %1105 = vmatprep.subr.mxu0 0.0
  %1106 = vmatpush1.msra.mxu0 0.0
  %1107 = vmatprep.subr.mxu0 0.0
  %1108 = vmatpush1.msra.mxu0 0.0
  %1109 = vmatprep.subr.mxu0 0.0
  %1110 = vmatpush1.msra.mxu0 0.0
  %1111 = vmatprep.subr.mxu0 0.0
  %1112 = vmatpush1.msra.mxu0 0.0
  %1113 = vmatprep.subr.mxu0 0.0
  %1114 = vmatpush1.msra.mxu0 0.0
  %1115 = vmatprep.subr.mxu0 0.0
  %1116 = vmatpush1.msra.mxu0 0.0
  %1117 = vmatprep.subr.mxu0 0.0
  %1118 = vmatpush1.msra.mxu0 0.0
  %1119 = vmatprep.subr.mxu0 0.0
  %1120 = vmatpush1.msra.mxu0 0.0
  %1121 = vmatprep.subr.mxu0 0.0
  %1122 = vmatpush1.msra.mxu0 0.0
  %1123 = vmatprep.subr.mxu0 0.0
  %1124 = vmatpush1.msra.mxu0 0.0
  %1125 = vmatprep.subr.mxu0 0.0
  %1126 = vmatpush1.msra.mxu0 0.0
  %1127 = vmatprep.mubr.f32.mxu0 0.0
  %1128 = vmatmul.mubr.f32.gmra.mrb[0].mxu0 %v1040
  %v1129 = vpop.f32.mrb[0].mxu0
  %v1130 = vadd.f32 %v1037, %v1129
  %v1131 = vpop.f32.mrb[0].mxu0
  %1132 = vmatprep.mubr.f32.mxu0 0.0
  %1133 = vmatmul.mubr.f32.gmra.mrb[0].mxu0 %v1043
  %v1134 = vpop.f32.mrb[0].mxu0
  %v1135 = vadd.f32 %v1037, %v1134
  %v1136 = vpop.f32.mrb[0].mxu0
  %1137 = vmatprep.mubr.f32.mxu0 0.0
  %1138 = vmatmul.mubr.f32.gmra.mrb[0].mxu0 %v1046
  %v1139 = vpop.f32.mrb[0].mxu0
  %v1140 = vadd.f32 %v1037, %v1139
  %v1141 = vpop.f32.mrb[0].mxu0
  %1142 = vmatprep.mubr.f32.mxu0 0.0
  %1143 = vmatmul.mubr.f32.gmra.mrb[0].mxu0 %v1049
  %v1144 = vpop.f32.mrb[0].mxu0
  %v1145 = vadd.f32 %v1037, %v1144
  %v1146 = vpop.f32.mrb[0].mxu0
  %1147 = vmatprep.mubr.f32.mxu0 0.0
  %1148 = vmatmul.mubr.f32.gmra.mrb[0].mxu0 %v1052
  %v1149 = vpop.f32.mrb[0].mxu0
  %v1150 = vadd.f32 %v1037, %v1149
  %v1151 = vpop.f32.mrb[0].mxu0
  %1152 = vmatprep.mubr.f32.mxu0 0.0
  %1153 = vmatmul.mubr.f32.gmra.mrb[0].mxu0 %v1055
  %v1154 = vpop.f32.mrb[0].mxu0
  %v1155 = vadd.f32 %v1037, %v1154
  %v1156 = vpop.f32.mrb[0].mxu0
  %1157 = vmatprep.mubr.f32.mxu0 0.0
  %1158 = vmatmul.mubr.f32.gmra.mrb[0].mxu0 %v1058
  %v1159 = vpop.f32.mrb[0].mxu0
  %v1160 = vadd.f32 %v1037, %v1159
  %v1161 = vpop.f32.mrb[0].mxu0
  %1162 = vmatprep.mubr.f32.mxu0 0.0
  %1163 = vmatmul.mubr.f32.gmra.mrb[0].mxu0 %v1061
  %v1164 = vpop.f32.mrb[0].mxu0
  %v1165 = vadd.f32 %v1037, %v1164
  %v1166 = vpop.f32.mrb[0].mxu0
  %1167 = vdwg.mxu0
  %s1168 = scalar_lea.vmem %s3, 32
  %v1169 = vld [vmem:[%s1168] sm:$0xff]
  %v1170 = vld [vmem:[%s1168 + $0x8] sm:$0xff]
  %v1171 = vld [vmem:[%s1168 + $0x10] sm:$0xff]
  %v1172 = vld [vmem:[%s1168 + $0x18] sm:$0xff]
  %s1173 = scalar_lea.vmem [#allocation2], 8
  %v1174 = vld [vmem:[%s1173] sm:$0xff]
  %s1175 = scalar_lea.vmem [#allocation3], 8
  %v1176 = vld [vmem:[%s1175] sm:$0xff]
  %v1178 = vsel %vm191, %v1174, 0
  %1180 = vmatprep.subr.mxu0 0.0
  %1181 = vmatpush1.msra.mxu0 %v1169
  %1182 = vmatprep.subr.mxu0 0.0
  %1183 = vmatpush1.msra.mxu0 %v1170
  %1184 = vmatprep.subr.mxu0 0.0
  %1185 = vmatpush1.msra.mxu0 %v1171
  %1186 = vmatprep.subr.mxu0 0.0
  %1187 = vmatpush1.msra.mxu0 %v1172
  %1188 = vmatprep.subr.mxu0 0.0
  %1189 = vmatpush1.msra.mxu0 0.0
  %1190 = vmatprep.subr.mxu0 0.0
  %1191 = vmatpush1.msra.mxu0 0.0
  %1192 = vmatprep.subr.mxu0 0.0
  %1193 = vmatpush1.msra.mxu0 0.0
  %1194 = vmatprep.subr.mxu0 0.0
  %1195 = vmatpush1.msra.mxu0 0.0
  %1196 = vmatprep.subr.mxu0 0.0
  %1197 = vmatpush1.msra.mxu0 0.0
  %1198 = vmatprep.subr.mxu0 0.0
  %1199 = vmatpush1.msra.mxu0 0.0
  %1200 = vmatprep.subr.mxu0 0.0
  %1201 = vmatpush1.msra.mxu0 0.0
  %1202 = vmatprep.subr.mxu0 0.0
  %1203 = vmatpush1.msra.mxu0 0.0
  %1204 = vmatprep.subr.mxu0 0.0
  %1205 = vmatpush1.msra.mxu0 0.0
  %1206 = vmatprep.subr.mxu0 0.0
  %1207 = vmatpush1.msra.mxu0 0.0
  %1208 = vmatprep.subr.mxu0 0.0
  %1209 = vmatpush1.msra.mxu0 0.0
  %1210 = vmatprep.subr.mxu0 0.0
  %1211 = vmatpush1.msra.mxu0 0.0
  %1212 = vmatprep.subr.mxu0 0.0
  %1213 = vmatpush1.msra.mxu0 0.0
  %1214 = vmatprep.subr.mxu0 0.0
  %1215 = vmatpush1.msra.mxu0 0.0
  %1216 = vmatprep.subr.mxu0 0.0
  %1217 = vmatpush1.msra.mxu0 0.0
  %1218 = vmatprep.subr.mxu0 0.0
  %1219 = vmatpush1.msra.mxu0 0.0
  %1220 = vmatprep.subr.mxu0 0.0
  %1221 = vmatpush1.msra.mxu0 0.0
  %1222 = vmatprep.subr.mxu0 0.0
  %1223 = vmatpush1.msra.mxu0 0.0
  %1224 = vmatprep.subr.mxu0 0.0
  %1225 = vmatpush1.msra.mxu0 0.0
  %1226 = vmatprep.subr.mxu0 0.0
  %1227 = vmatpush1.msra.mxu0 0.0
  %1228 = vmatprep.subr.mxu0 0.0
  %1229 = vmatpush1.msra.mxu0 0.0
  %1230 = vmatprep.subr.mxu0 0.0
  %1231 = vmatpush1.msra.mxu0 0.0
  %1232 = vmatprep.subr.mxu0 0.0
  %1233 = vmatpush1.msra.mxu0 0.0
  %1234 = vmatprep.subr.mxu0 0.0
  %1235 = vmatpush1.msra.mxu0 0.0
  %1236 = vmatprep.subr.mxu0 0.0
  %1237 = vmatpush1.msra.mxu0 0.0
  %1238 = vmatprep.subr.mxu0 0.0
  %1239 = vmatpush1.msra.mxu0 0.0
  %1240 = vmatprep.subr.mxu0 0.0
  %1241 = vmatpush1.msra.mxu0 0.0
  %1242 = vmatprep.subr.mxu0 0.0
  %1243 = vmatpush1.msra.mxu0 0.0
  %1244 = vmatprep.mubr.f32.mxu0 0.0
  %1245 = vmatmul.mubr.f32.gmra.mrb[0].mxu0 %v1178
  %v1246 = vpop.f32.mrb[0].mxu0
  %v1247 = vadd.f32 0.0, %v1246
  %v1248 = vpop.f32.mrb[0].mxu0
  %1249 = vdwg.mxu0
  %v1250 = vadd.f32 %v1130, %v1247
  %v1251 = vxor.u32 %v1250, 2147483648
  %v1252 = vmul.f32 %v1251, 1.442695
  %v1253 = vpow.pop %v1252
  %v1254 = vadd.f32 %v1253, 1.0
  %v1255 = vrcp.pop %v1254
  %v1256 = vmul.f32 1.0, %v1255
  %v1257 = vtanh.pop %v1250
  %1259 = vrot.lane.b32.xlu0 %v1176, 32
  %v1260 = vpop.permute.xlu0 %1259
  %v1262 = vmul.f32 %v1256, %v1260
  %1264 = vrot.lane.b32.xlu0 %v1257, 32
  %v1265 = vpop.permute.xlu0 %1264
  %v1267 = vmul.f32 %v1256, %v1265
  %1269 = vrot.lane.b32.xlu0 %v1267, 32
  %v1270 = vpop.permute.xlu0 %1269
  %v1272 = vadd.f32 %v1262, %v1270
  %v1273 = vtanh.pop %v1272
  %1275 = vrot.lane.b32.xlu0 %v1273, 32
  %v1276 = vpop.permute.xlu0 %1275
  %v1278 = vmul.f32 %v1256, %v1276
  %1280 = vrot.lane.b32.xlu0 %v1278, 64
  %v1281 = vpop.permute.xlu0 %1280
  %v1282 = vsel %vm191, %v1281, 0
  %1284 = vmatprep.subr.mxu0 0.0
  %1285 = vmatpush1.msra.mxu0 %v1169
  %1286 = vmatprep.subr.mxu0 0.0
  %1287 = vmatpush1.msra.mxu0 %v1170
  %1288 = vmatprep.subr.mxu0 0.0
  %1289 = vmatpush1.msra.mxu0 %v1171
  %1290 = vmatprep.subr.mxu0 0.0
  %1291 = vmatpush1.msra.mxu0 %v1172
  %1292 = vmatprep.subr.mxu0 0.0
  %1293 = vmatpush1.msra.mxu0 0.0
  %1294 = vmatprep.subr.mxu0 0.0
  %1295 = vmatpush1.msra.mxu0 0.0
  %1296 = vmatprep.subr.mxu0 0.0
  %1297 = vmatpush1.msra.mxu0 0.0
  %1298 = vmatprep.subr.mxu0 0.0
  %1299 = vmatpush1.msra.mxu0 0.0
  %1300 = vmatprep.subr.mxu0 0.0
  %1301 = vmatpush1.msra.mxu0 0.0
  %1302 = vmatprep.subr.mxu0 0.0
  %1303 = vmatpush1.msra.mxu0 0.0
  %1304 = vmatprep.subr.mxu0 0.0
  %1305 = vmatpush1.msra.mxu0 0.0
  %1306 = vmatprep.subr.mxu0 0.0
  %1307 = vmatpush1.msra.mxu0 0.0
  %1308 = vmatprep.subr.mxu0 0.0
  %1309 = vmatpush1.msra.mxu0 0.0
  %1310 = vmatprep.subr.mxu0 0.0
  %1311 = vmatpush1.msra.mxu0 0.0
  %1312 = vmatprep.subr.mxu0 0.0
  %1313 = vmatpush1.msra.mxu0 0.0
  %1314 = vmatprep.subr.mxu0 0.0
  %1315 = vmatpush1.msra.mxu0 0.0
  %1316 = vmatprep.subr.mxu0 0.0
  %1317 = vmatpush1.msra.mxu0 0.0
  %1318 = vmatprep.subr.mxu0 0.0
  %1319 = vmatpush1.msra.mxu0 0.0
  %1320 = vmatprep.subr.mxu0 0.0
  %1321 = vmatpush1.msra.mxu0 0.0
  %1322 = vmatprep.subr.mxu0 0.0
  %1323 = vmatpush1.msra.mxu0 0.0
  %1324 = vmatprep.subr.mxu0 0.0
  %1325 = vmatpush1.msra.mxu0 0.0
  %1326 = vmatprep.subr.mxu0 0.0
  %1327 = vmatpush1.msra.mxu0 0.0
  %1328 = vmatprep.subr.mxu0 0.0
  %1329 = vmatpush1.msra.mxu0 0.0
  %1330 = vmatprep.subr.mxu0 0.0
  %1331 = vmatpush1.msra.mxu0 0.0
  %1332 = vmatprep.subr.mxu0 0.0
  %1333 = vmatpush1.msra.mxu0 0.0
  %1334 = vmatprep.subr.mxu0 0.0
  %1335 = vmatpush1.msra.mxu0 0.0
  %1336 = vmatprep.subr.mxu0 0.0
  %1337 = vmatpush1.msra.mxu0 0.0
  %1338 = vmatprep.subr.mxu0 0.0
  %1339 = vmatpush1.msra.mxu0 0.0
  %1340 = vmatprep.subr.mxu0 0.0
  %1341 = vmatpush1.msra.mxu0 0.0
  %1342 = vmatprep.subr.mxu0 0.0
  %1343 = vmatpush1.msra.mxu0 0.0
  %1344 = vmatprep.subr.mxu0 0.0
  %1345 = vmatpush1.msra.mxu0 0.0
  %1346 = vmatprep.subr.mxu0 0.0
  %1347 = vmatpush1.msra.mxu0 0.0
  %1348 = vmatprep.mubr.f32.mxu0 0.0
  %1349 = vmatmul.mubr.f32.gmra.mrb[0].mxu0 %v1282
  %v1350 = vpop.f32.mrb[0].mxu0
  %v1351 = vadd.f32 0.0, %v1350
  %v1352 = vpop.f32.mrb[0].mxu0
  %1353 = vdwg.mxu0
  %v1354 = vadd.f32 %v1135, %v1351
  %v1355 = vxor.u32 %v1354, 2147483648
  %v1356 = vmul.f32 %v1355, 1.442695
  %v1357 = vpow.pop %v1356
  %v1358 = vadd.f32 %v1357, 1.0
  %v1359 = vrcp.pop %v1358
  %v1360 = vmul.f32 1.0, %v1359
  %v1361 = vtanh.pop %v1354
  %v1362 = vmul.f32 %v1360, %v1272
  %1364 = vrot.lane.b32.xlu0 %v1361, 32
  %v1365 = vpop.permute.xlu0 %1364
  %v1367 = vmul.f32 %v1360, %v1365
  %1369 = vrot.lane.b32.xlu0 %v1367, 32
  %v1370 = vpop.permute.xlu0 %1369
  %v1372 = vadd.f32 %v1362, %v1370
  %v1373 = vtanh.pop %v1372
  %1375 = vrot.lane.b32.xlu0 %v1373, 32
  %v1376 = vpop.permute.xlu0 %1375
  %v1378 = vmul.f32 %v1360, %v1376
  %1380 = vrot.lane.b32.xlu0 %v1378, 64
  %v1381 = vpop.permute.xlu0 %1380
  %v1382 = vsel %vm191, %v1381, 0
  %1384 = vmatprep.subr.mxu0 0.0
  %1385 = vmatpush1.msra.mxu0 %v1169
  %1386 = vmatprep.subr.mxu0 0.0
  %1387 = vmatpush1.msra.mxu0 %v1170
  %1388 = vmatprep.subr.mxu0 0.0
  %1389 = vmatpush1.msra.mxu0 %v1171
  %1390 = vmatprep.subr.mxu0 0.0
  %1391 = vmatpush1.msra.mxu0 %v1172
  %1392 = vmatprep.subr.mxu0 0.0
  %1393 = vmatpush1.msra.mxu0 0.0
  %1394 = vmatprep.subr.mxu0 0.0
  %1395 = vmatpush1.msra.mxu0 0.0
  %1396 = vmatprep.subr.mxu0 0.0
  %1397 = vmatpush1.msra.mxu0 0.0
  %1398 = vmatprep.subr.mxu0 0.0
  %1399 = vmatpush1.msra.mxu0 0.0
  %1400 = vmatprep.subr.mxu0 0.0
  %1401 = vmatpush1.msra.mxu0 0.0
  %1402 = vmatprep.subr.mxu0 0.0
  %1403 = vmatpush1.msra.mxu0 0.0
  %1404 = vmatprep.subr.mxu0 0.0
  %1405 = vmatpush1.msra.mxu0 0.0
  %1406 = vmatprep.subr.mxu0 0.0
  %1407 = vmatpush1.msra.mxu0 0.0
  %1408 = vmatprep.subr.mxu0 0.0
  %1409 = vmatpush1.msra.mxu0 0.0
  %1410 = vmatprep.subr.mxu0 0.0
  %1411 = vmatpush1.msra.mxu0 0.0
  %1412 = vmatprep.subr.mxu0 0.0
  %1413 = vmatpush1.msra.mxu0 0.0
  %1414 = vmatprep.subr.mxu0 0.0
  %1415 = vmatpush1.msra.mxu0 0.0
  %1416 = vmatprep.subr.mxu0 0.0
  %1417 = vmatpush1.msra.mxu0 0.0
  %1418 = vmatprep.subr.mxu0 0.0
  %1419 = vmatpush1.msra.mxu0 0.0
  %1420 = vmatprep.subr.mxu0 0.0
  %1421 = vmatpush1.msra.mxu0 0.0
  %1422 = vmatprep.subr.mxu0 0.0
  %1423 = vmatpush1.msra.mxu0 0.0
  %1424 = vmatprep.subr.mxu0 0.0
  %1425 = vmatpush1.msra.mxu0 0.0
  %1426 = vmatprep.subr.mxu0 0.0
  %1427 = vmatpush1.msra.mxu0 0.0
  %1428 = vmatprep.subr.mxu0 0.0
  %1429 = vmatpush1.msra.mxu0 0.0
  %1430 = vmatprep.subr.mxu0 0.0
  %1431 = vmatpush1.msra.mxu0 0.0
  %1432 = vmatprep.subr.mxu0 0.0
  %1433 = vmatpush1.msra.mxu0 0.0
  %1434 = vmatprep.subr.mxu0 0.0
  %1435 = vmatpush1.msra.mxu0 0.0
  %1436 = vmatprep.subr.mxu0 0.0
  %1437 = vmatpush1.msra.mxu0 0.0
  %1438 = vmatprep.subr.mxu0 0.0
  %1439 = vmatpush1.msra.mxu0 0.0
  %1440 = vmatprep.subr.mxu0 0.0
  %1441 = vmatpush1.msra.mxu0 0.0
  %1442 = vmatprep.subr.mxu0 0.0
  %1443 = vmatpush1.msra.mxu0 0.0
  %1444 = vmatprep.subr.mxu0 0.0
  %1445 = vmatpush1.msra.mxu0 0.0
  %1446 = vmatprep.subr.mxu0 0.0
  %1447 = vmatpush1.msra.mxu0 0.0
  %1448 = vmatprep.mubr.f32.mxu0 0.0
  %1449 = vmatmul.mubr.f32.gmra.mrb[0].mxu0 %v1382
  %v1450 = vpop.f32.mrb[0].mxu0
  %v1451 = vadd.f32 0.0, %v1450
  %v1452 = vpop.f32.mrb[0].mxu0
  %1453 = vdwg.mxu0
  %v1454 = vadd.f32 %v1140, %v1451
  %v1455 = vxor.u32 %v1454, 2147483648
  %v1456 = vmul.f32 %v1455, 1.442695
  %v1457 = vpow.pop %v1456
  %v1458 = vadd.f32 %v1457, 1.0
  %v1459 = vrcp.pop %v1458
  %v1460 = vmul.f32 1.0, %v1459
  %v1461 = vtanh.pop %v1454
  %v1462 = vmul.f32 %v1460, %v1372
  %1464 = vrot.lane.b32.xlu0 %v1461, 32
  %v1465 = vpop.permute.xlu0 %1464
  %v1467 = vmul.f32 %v1460, %v1465
  %1469 = vrot.lane.b32.xlu0 %v1467, 32
  %v1470 = vpop.permute.xlu0 %1469
  %v1472 = vadd.f32 %v1462, %v1470
  %v1473 = vtanh.pop %v1472
  %1475 = vrot.lane.b32.xlu0 %v1473, 32
  %v1476 = vpop.permute.xlu0 %1475
  %v1478 = vmul.f32 %v1460, %v1476
  %1480 = vrot.lane.b32.xlu0 %v1478, 64
  %v1481 = vpop.permute.xlu0 %1480
  %v1482 = vsel %vm191, %v1481, 0
  %1484 = vmatprep.subr.mxu0 0.0
  %1485 = vmatpush1.msra.mxu0 %v1169
  %1486 = vmatprep.subr.mxu0 0.0
  %1487 = vmatpush1.msra.mxu0 %v1170
  %1488 = vmatprep.subr.mxu0 0.0
  %1489 = vmatpush1.msra.mxu0 %v1171
  %1490 = vmatprep.subr.mxu0 0.0
  %1491 = vmatpush1.msra.mxu0 %v1172
  %1492 = vmatprep.subr.mxu0 0.0
  %1493 = vmatpush1.msra.mxu0 0.0
  %1494 = vmatprep.subr.mxu0 0.0
  %1495 = vmatpush1.msra.mxu0 0.0
  %1496 = vmatprep.subr.mxu0 0.0
  %1497 = vmatpush1.msra.mxu0 0.0
  %1498 = vmatprep.subr.mxu0 0.0
  %1499 = vmatpush1.msra.mxu0 0.0
  %1500 = vmatprep.subr.mxu0 0.0
  %1501 = vmatpush1.msra.mxu0 0.0
  %1502 = vmatprep.subr.mxu0 0.0
  %1503 = vmatpush1.msra.mxu0 0.0
  %1504 = vmatprep.subr.mxu0 0.0
  %1505 = vmatpush1.msra.mxu0 0.0
  %1506 = vmatprep.subr.mxu0 0.0
  %1507 = vmatpush1.msra.mxu0 0.0
  %1508 = vmatprep.subr.mxu0 0.0
  %1509 = vmatpush1.msra.mxu0 0.0
  %1510 = vmatprep.subr.mxu0 0.0
  %1511 = vmatpush1.msra.mxu0 0.0
  %1512 = vmatprep.subr.mxu0 0.0
  %1513 = vmatpush1.msra.mxu0 0.0
  %1514 = vmatprep.subr.mxu0 0.0
  %1515 = vmatpush1.msra.mxu0 0.0
  %1516 = vmatprep.subr.mxu0 0.0
  %1517 = vmatpush1.msra.mxu0 0.0
  %1518 = vmatprep.subr.mxu0 0.0
  %1519 = vmatpush1.msra.mxu0 0.0
  %1520 = vmatprep.subr.mxu0 0.0
  %1521 = vmatpush1.msra.mxu0 0.0
  %1522 = vmatprep.subr.mxu0 0.0
  %1523 = vmatpush1.msra.mxu0 0.0
  %1524 = vmatprep.subr.mxu0 0.0
  %1525 = vmatpush1.msra.mxu0 0.0
  %1526 = vmatprep.subr.mxu0 0.0
  %1527 = vmatpush1.msra.mxu0 0.0
  %1528 = vmatprep.subr.mxu0 0.0
  %1529 = vmatpush1.msra.mxu0 0.0
  %1530 = vmatprep.subr.mxu0 0.0
  %1531 = vmatpush1.msra.mxu0 0.0
  %1532 = vmatprep.subr.mxu0 0.0
  %1533 = vmatpush1.msra.mxu0 0.0
  %1534 = vmatprep.subr.mxu0 0.0
  %1535 = vmatpush1.msra.mxu0 0.0
  %1536 = vmatprep.subr.mxu0 0.0
  %1537 = vmatpush1.msra.mxu0 0.0
  %1538 = vmatprep.subr.mxu0 0.0
  %1539 = vmatpush1.msra.mxu0 0.0
  %1540 = vmatprep.subr.mxu0 0.0
  %1541 = vmatpush1.msra.mxu0 0.0
  %1542 = vmatprep.subr.mxu0 0.0
  %1543 = vmatpush1.msra.mxu0 0.0
  %1544 = vmatprep.subr.mxu0 0.0
  %1545 = vmatpush1.msra.mxu0 0.0
  %1546 = vmatprep.subr.mxu0 0.0
  %1547 = vmatpush1.msra.mxu0 0.0
  %1548 = vmatprep.mubr.f32.mxu0 0.0
  %1549 = vmatmul.mubr.f32.gmra.mrb[0].mxu0 %v1482
  %v1550 = vpop.f32.mrb[0].mxu0
  %v1551 = vadd.f32 0.0, %v1550
  %v1552 = vpop.f32.mrb[0].mxu0
  %1553 = vdwg.mxu0
  %v1554 = vadd.f32 %v1145, %v1551
  %v1555 = vxor.u32 %v1554, 2147483648
  %v1556 = vmul.f32 %v1555, 1.442695
  %v1557 = vpow.pop %v1556
  %v1558 = vadd.f32 %v1557, 1.0
  %v1559 = vrcp.pop %v1558
  %v1560 = vmul.f32 1.0, %v1559
  %v1561 = vtanh.pop %v1554
  %v1562 = vmul.f32 %v1560, %v1472
  %1564 = vrot.lane.b32.xlu0 %v1561, 32
  %v1565 = vpop.permute.xlu0 %1564
  %v1567 = vmul.f32 %v1560, %v1565
  %1569 = vrot.lane.b32.xlu0 %v1567, 32
  %v1570 = vpop.permute.xlu0 %1569
  %v1572 = vadd.f32 %v1562, %v1570
  %v1573 = vtanh.pop %v1572
  %1575 = vrot.lane.b32.xlu0 %v1573, 32
  %v1576 = vpop.permute.xlu0 %1575
  %v1578 = vmul.f32 %v1560, %v1576
  %1580 = vrot.lane.b32.xlu0 %v1578, 64
  %v1581 = vpop.permute.xlu0 %1580
  %v1582 = vsel %vm191, %v1581, 0
  %1584 = vmatprep.subr.mxu0 0.0
  %1585 = vmatpush1.msra.mxu0 %v1169
  %1586 = vmatprep.subr.mxu0 0.0
  %1587 = vmatpush1.msra.mxu0 %v1170
  %1588 = vmatprep.subr.mxu0 0.0
  %1589 = vmatpush1.msra.mxu0 %v1171
  %1590 = vmatprep.subr.mxu0 0.0
  %1591 = vmatpush1.msra.mxu0 %v1172
  %1592 = vmatprep.subr.mxu0 0.0
  %1593 = vmatpush1.msra.mxu0 0.0
  %1594 = vmatprep.subr.mxu0 0.0
  %1595 = vmatpush1.msra.mxu0 0.0
  %1596 = vmatprep.subr.mxu0 0.0
  %1597 = vmatpush1.msra.mxu0 0.0
  %1598 = vmatprep.subr.mxu0 0.0
  %1599 = vmatpush1.msra.mxu0 0.0
  %1600 = vmatprep.subr.mxu0 0.0
  %1601 = vmatpush1.msra.mxu0 0.0
  %1602 = vmatprep.subr.mxu0 0.0
  %1603 = vmatpush1.msra.mxu0 0.0
  %1604 = vmatprep.subr.mxu0 0.0
  %1605 = vmatpush1.msra.mxu0 0.0
  %1606 = vmatprep.subr.mxu0 0.0
  %1607 = vmatpush1.msra.mxu0 0.0
  %1608 = vmatprep.subr.mxu0 0.0
  %1609 = vmatpush1.msra.mxu0 0.0
  %1610 = vmatprep.subr.mxu0 0.0
  %1611 = vmatpush1.msra.mxu0 0.0
  %1612 = vmatprep.subr.mxu0 0.0
  %1613 = vmatpush1.msra.mxu0 0.0
  %1614 = vmatprep.subr.mxu0 0.0
  %1615 = vmatpush1.msra.mxu0 0.0
  %1616 = vmatprep.subr.mxu0 0.0
  %1617 = vmatpush1.msra.mxu0 0.0
  %1618 = vmatprep.subr.mxu0 0.0
  %1619 = vmatpush1.msra.mxu0 0.0
  %1620 = vmatprep.subr.mxu0 0.0
  %1621 = vmatpush1.msra.mxu0 0.0
  %1622 = vmatprep.subr.mxu0 0.0
  %1623 = vmatpush1.msra.mxu0 0.0
  %1624 = vmatprep.subr.mxu0 0.0
  %1625 = vmatpush1.msra.mxu0 0.0
  %1626 = vmatprep.subr.mxu0 0.0
  %1627 = vmatpush1.msra.mxu0 0.0
  %1628 = vmatprep.subr.mxu0 0.0
  %1629 = vmatpush1.msra.mxu0 0.0
  %1630 = vmatprep.subr.mxu0 0.0
  %1631 = vmatpush1.msra.mxu0 0.0
  %1632 = vmatprep.subr.mxu0 0.0
  %1633 = vmatpush1.msra.mxu0 0.0
  %1634 = vmatprep.subr.mxu0 0.0
  %1635 = vmatpush1.msra.mxu0 0.0
  %1636 = vmatprep.subr.mxu0 0.0
  %1637 = vmatpush1.msra.mxu0 0.0
  %1638 = vmatprep.subr.mxu0 0.0
  %1639 = vmatpush1.msra.mxu0 0.0
  %1640 = vmatprep.subr.mxu0 0.0
  %1641 = vmatpush1.msra.mxu0 0.0
  %1642 = vmatprep.subr.mxu0 0.0
  %1643 = vmatpush1.msra.mxu0 0.0
  %1644 = vmatprep.subr.mxu0 0.0
  %1645 = vmatpush1.msra.mxu0 0.0
  %1646 = vmatprep.subr.mxu0 0.0
  %1647 = vmatpush1.msra.mxu0 0.0
  %1648 = vmatprep.mubr.f32.mxu0 0.0
  %1649 = vmatmul.mubr.f32.gmra.mrb[0].mxu0 %v1582
  %v1650 = vpop.f32.mrb[0].mxu0
  %v1651 = vadd.f32 0.0, %v1650
  %v1652 = vpop.f32.mrb[0].mxu0
  %1653 = vdwg.mxu0
  %v1654 = vadd.f32 %v1150, %v1651
  %v1655 = vxor.u32 %v1654, 2147483648
  %v1656 = vmul.f32 %v1655, 1.442695
  %v1657 = vpow.pop %v1656
  %v1658 = vadd.f32 %v1657, 1.0
  %v1659 = vrcp.pop %v1658
  %v1660 = vmul.f32 1.0, %v1659
  %v1661 = vtanh.pop %v1654
  %v1662 = vmul.f32 %v1660, %v1572
  %1664 = vrot.lane.b32.xlu0 %v1661, 32
  %v1665 = vpop.permute.xlu0 %1664
  %v1667 = vmul.f32 %v1660, %v1665
  %1669 = vrot.lane.b32.xlu0 %v1667, 32
  %v1670 = vpop.permute.xlu0 %1669
  %v1672 = vadd.f32 %v1662, %v1670
  %v1673 = vtanh.pop %v1672
  %1675 = vrot.lane.b32.xlu0 %v1673, 32
  %v1676 = vpop.permute.xlu0 %1675
  %v1678 = vmul.f32 %v1660, %v1676
  %1680 = vrot.lane.b32.xlu0 %v1678, 64
  %v1681 = vpop.permute.xlu0 %1680
  %v1682 = vsel %vm191, %v1681, 0
  %1684 = vmatprep.subr.mxu0 0.0
  %1685 = vmatpush1.msra.mxu0 %v1169
  %1686 = vmatprep.subr.mxu0 0.0
  %1687 = vmatpush1.msra.mxu0 %v1170
  %1688 = vmatprep.subr.mxu0 0.0
  %1689 = vmatpush1.msra.mxu0 %v1171
  %1690 = vmatprep.subr.mxu0 0.0
  %1691 = vmatpush1.msra.mxu0 %v1172
  %1692 = vmatprep.subr.mxu0 0.0
  %1693 = vmatpush1.msra.mxu0 0.0
  %1694 = vmatprep.subr.mxu0 0.0
  %1695 = vmatpush1.msra.mxu0 0.0
  %1696 = vmatprep.subr.mxu0 0.0
  %1697 = vmatpush1.msra.mxu0 0.0
  %1698 = vmatprep.subr.mxu0 0.0
  %1699 = vmatpush1.msra.mxu0 0.0
  %1700 = vmatprep.subr.mxu0 0.0
  %1701 = vmatpush1.msra.mxu0 0.0
  %1702 = vmatprep.subr.mxu0 0.0
  %1703 = vmatpush1.msra.mxu0 0.0
  %1704 = vmatprep.subr.mxu0 0.0
  %1705 = vmatpush1.msra.mxu0 0.0
  %1706 = vmatprep.subr.mxu0 0.0
  %1707 = vmatpush1.msra.mxu0 0.0
  %1708 = vmatprep.subr.mxu0 0.0
  %1709 = vmatpush1.msra.mxu0 0.0
  %1710 = vmatprep.subr.mxu0 0.0
  %1711 = vmatpush1.msra.mxu0 0.0
  %1712 = vmatprep.subr.mxu0 0.0
  %1713 = vmatpush1.msra.mxu0 0.0
  %1714 = vmatprep.subr.mxu0 0.0
  %1715 = vmatpush1.msra.mxu0 0.0
  %1716 = vmatprep.subr.mxu0 0.0
  %1717 = vmatpush1.msra.mxu0 0.0
  %1718 = vmatprep.subr.mxu0 0.0
  %1719 = vmatpush1.msra.mxu0 0.0
  %1720 = vmatprep.subr.mxu0 0.0
  %1721 = vmatpush1.msra.mxu0 0.0
  %1722 = vmatprep.subr.mxu0 0.0
  %1723 = vmatpush1.msra.mxu0 0.0
  %1724 = vmatprep.subr.mxu0 0.0
  %1725 = vmatpush1.msra.mxu0 0.0
  %1726 = vmatprep.subr.mxu0 0.0
  %1727 = vmatpush1.msra.mxu0 0.0
  %1728 = vmatprep.subr.mxu0 0.0
  %1729 = vmatpush1.msra.mxu0 0.0
  %1730 = vmatprep.subr.mxu0 0.0
  %1731 = vmatpush1.msra.mxu0 0.0
  %1732 = vmatprep.subr.mxu0 0.0
  %1733 = vmatpush1.msra.mxu0 0.0
  %1734 = vmatprep.subr.mxu0 0.0
  %1735 = vmatpush1.msra.mxu0 0.0
  %1736 = vmatprep.subr.mxu0 0.0
  %1737 = vmatpush1.msra.mxu0 0.0
  %1738 = vmatprep.subr.mxu0 0.0
  %1739 = vmatpush1.msra.mxu0 0.0
  %1740 = vmatprep.subr.mxu0 0.0
  %1741 = vmatpush1.msra.mxu0 0.0
  %1742 = vmatprep.subr.mxu0 0.0
  %1743 = vmatpush1.msra.mxu0 0.0
  %1744 = vmatprep.subr.mxu0 0.0
  %1745 = vmatpush1.msra.mxu0 0.0
  %1746 = vmatprep.subr.mxu0 0.0
  %1747 = vmatpush1.msra.mxu0 0.0
  %1748 = vmatprep.mubr.f32.mxu0 0.0
  %1749 = vmatmul.mubr.f32.gmra.mrb[0].mxu0 %v1682
  %v1750 = vpop.f32.mrb[0].mxu0
  %v1751 = vadd.f32 0.0, %v1750
  %v1752 = vpop.f32.mrb[0].mxu0
  %1753 = vdwg.mxu0
  %v1754 = vadd.f32 %v1155, %v1751
  %v1755 = vxor.u32 %v1754, 2147483648
  %v1756 = vmul.f32 %v1755, 1.442695
  %v1757 = vpow.pop %v1756
  %v1758 = vadd.f32 %v1757, 1.0
  %v1759 = vrcp.pop %v1758
  %v1760 = vmul.f32 1.0, %v1759
  %v1761 = vtanh.pop %v1754
  %v1762 = vmul.f32 %v1760, %v1672
  %1764 = vrot.lane.b32.xlu0 %v1761, 32
  %v1765 = vpop.permute.xlu0 %1764
  %v1767 = vmul.f32 %v1760, %v1765
  %1769 = vrot.lane.b32.xlu0 %v1767, 32
  %v1770 = vpop.permute.xlu0 %1769
  %v1772 = vadd.f32 %v1762, %v1770
  %v1773 = vtanh.pop %v1772
  %1775 = vrot.lane.b32.xlu0 %v1773, 32
  %v1776 = vpop.permute.xlu0 %1775
  %v1778 = vmul.f32 %v1760, %v1776
  %1780 = vrot.lane.b32.xlu0 %v1778, 64
  %v1781 = vpop.permute.xlu0 %1780
  %v1782 = vsel %vm191, %v1781, 0
  %1784 = vmatprep.subr.mxu0 0.0
  %1785 = vmatpush1.msra.mxu0 %v1169
  %1786 = vmatprep.subr.mxu0 0.0
  %1787 = vmatpush1.msra.mxu0 %v1170
  %1788 = vmatprep.subr.mxu0 0.0
  %1789 = vmatpush1.msra.mxu0 %v1171
  %1790 = vmatprep.subr.mxu0 0.0
  %1791 = vmatpush1.msra.mxu0 %v1172
  %1792 = vmatprep.subr.mxu0 0.0
  %1793 = vmatpush1.msra.mxu0 0.0
  %1794 = vmatprep.subr.mxu0 0.0
  %1795 = vmatpush1.msra.mxu0 0.0
  %1796 = vmatprep.subr.mxu0 0.0
  %1797 = vmatpush1.msra.mxu0 0.0
  %1798 = vmatprep.subr.mxu0 0.0
  %1799 = vmatpush1.msra.mxu0 0.0
  %1800 = vmatprep.subr.mxu0 0.0
  %1801 = vmatpush1.msra.mxu0 0.0
  %1802 = vmatprep.subr.mxu0 0.0
  %1803 = vmatpush1.msra.mxu0 0.0
  %1804 = vmatprep.subr.mxu0 0.0
  %1805 = vmatpush1.msra.mxu0 0.0
  %1806 = vmatprep.subr.mxu0 0.0
  %1807 = vmatpush1.msra.mxu0 0.0
  %1808 = vmatprep.subr.mxu0 0.0
  %1809 = vmatpush1.msra.mxu0 0.0
  %1810 = vmatprep.subr.mxu0 0.0
  %1811 = vmatpush1.msra.mxu0 0.0
  %1812 = vmatprep.subr.mxu0 0.0
  %1813 = vmatpush1.msra.mxu0 0.0
  %1814 = vmatprep.subr.mxu0 0.0
  %1815 = vmatpush1.msra.mxu0 0.0
  %1816 = vmatprep.subr.mxu0 0.0
  %1817 = vmatpush1.msra.mxu0 0.0
  %1818 = vmatprep.subr.mxu0 0.0
  %1819 = vmatpush1.msra.mxu0 0.0
  %1820 = vmatprep.subr.mxu0 0.0
  %1821 = vmatpush1.msra.mxu0 0.0
  %1822 = vmatprep.subr.mxu0 0.0
  %1823 = vmatpush1.msra.mxu0 0.0
  %1824 = vmatprep.subr.mxu0 0.0
  %1825 = vmatpush1.msra.mxu0 0.0
  %1826 = vmatprep.subr.mxu0 0.0
  %1827 = vmatpush1.msra.mxu0 0.0
  %1828 = vmatprep.subr.mxu0 0.0
  %1829 = vmatpush1.msra.mxu0 0.0
  %1830 = vmatprep.subr.mxu0 0.0
  %1831 = vmatpush1.msra.mxu0 0.0
  %1832 = vmatprep.subr.mxu0 0.0
  %1833 = vmatpush1.msra.mxu0 0.0
  %1834 = vmatprep.subr.mxu0 0.0
  %1835 = vmatpush1.msra.mxu0 0.0
  %1836 = vmatprep.subr.mxu0 0.0
  %1837 = vmatpush1.msra.mxu0 0.0
  %1838 = vmatprep.subr.mxu0 0.0
  %1839 = vmatpush1.msra.mxu0 0.0
  %1840 = vmatprep.subr.mxu0 0.0
  %1841 = vmatpush1.msra.mxu0 0.0
  %1842 = vmatprep.subr.mxu0 0.0
  %1843 = vmatpush1.msra.mxu0 0.0
  %1844 = vmatprep.subr.mxu0 0.0
  %1845 = vmatpush1.msra.mxu0 0.0
  %1846 = vmatprep.subr.mxu0 0.0
  %1847 = vmatpush1.msra.mxu0 0.0
  %1848 = vmatprep.mubr.f32.mxu0 0.0
  %1849 = vmatmul.mubr.f32.gmra.mrb[0].mxu0 %v1782
  %v1850 = vpop.f32.mrb[0].mxu0
  %v1851 = vadd.f32 0.0, %v1850
  %v1852 = vpop.f32.mrb[0].mxu0
  %1853 = vdwg.mxu0
  %v1854 = vadd.f32 %v1160, %v1851
  %v1855 = vxor.u32 %v1854, 2147483648
  %v1856 = vmul.f32 %v1855, 1.442695
  %v1857 = vpow.pop %v1856
  %v1858 = vadd.f32 %v1857, 1.0
  %v1859 = vrcp.pop %v1858
  %v1860 = vmul.f32 1.0, %v1859
  %v1861 = vtanh.pop %v1854
  %v1862 = vmul.f32 %v1860, %v1772
  %1864 = vrot.lane.b32.xlu0 %v1861, 32
  %v1865 = vpop.permute.xlu0 %1864
  %v1867 = vmul.f32 %v1860, %v1865
  %1869 = vrot.lane.b32.xlu0 %v1867, 32
  %v1870 = vpop.permute.xlu0 %1869
  %v1872 = vadd.f32 %v1862, %v1870
  %v1873 = vtanh.pop %v1872
  %1875 = vrot.lane.b32.xlu0 %v1873, 32
  %v1876 = vpop.permute.xlu0 %1875
  %v1878 = vmul.f32 %v1860, %v1876
  %1880 = vrot.lane.b32.xlu0 %v1878, 64
  %v1881 = vpop.permute.xlu0 %1880
  %v1882 = vsel %vm191, %v1881, 0
  %1884 = vmatprep.subr.mxu0 0.0
  %1885 = vmatpush1.msra.mxu0 %v1169
  %1886 = vmatprep.subr.mxu0 0.0
  %1887 = vmatpush1.msra.mxu0 %v1170
  %1888 = vmatprep.subr.mxu0 0.0
  %1889 = vmatpush1.msra.mxu0 %v1171
  %1890 = vmatprep.subr.mxu0 0.0
  %1891 = vmatpush1.msra.mxu0 %v1172
  %1892 = vmatprep.subr.mxu0 0.0
  %1893 = vmatpush1.msra.mxu0 0.0
  %1894 = vmatprep.subr.mxu0 0.0
  %1895 = vmatpush1.msra.mxu0 0.0
  %1896 = vmatprep.subr.mxu0 0.0
  %1897 = vmatpush1.msra.mxu0 0.0
  %1898 = vmatprep.subr.mxu0 0.0
  %1899 = vmatpush1.msra.mxu0 0.0
  %1900 = vmatprep.subr.mxu0 0.0
  %1901 = vmatpush1.msra.mxu0 0.0
  %1902 = vmatprep.subr.mxu0 0.0
  %1903 = vmatpush1.msra.mxu0 0.0
  %1904 = vmatprep.subr.mxu0 0.0
  %1905 = vmatpush1.msra.mxu0 0.0
  %1906 = vmatprep.subr.mxu0 0.0
  %1907 = vmatpush1.msra.mxu0 0.0
  %1908 = vmatprep.subr.mxu0 0.0
  %1909 = vmatpush1.msra.mxu0 0.0
  %1910 = vmatprep.subr.mxu0 0.0
  %1911 = vmatpush1.msra.mxu0 0.0
  %1912 = vmatprep.subr.mxu0 0.0
  %1913 = vmatpush1.msra.mxu0 0.0
  %1914 = vmatprep.subr.mxu0 0.0
  %1915 = vmatpush1.msra.mxu0 0.0
  %1916 = vmatprep.subr.mxu0 0.0
  %1917 = vmatpush1.msra.mxu0 0.0
  %1918 = vmatprep.subr.mxu0 0.0
  %1919 = vmatpush1.msra.mxu0 0.0
  %1920 = vmatprep.subr.mxu0 0.0
  %1921 = vmatpush1.msra.mxu0 0.0
  %1922 = vmatprep.subr.mxu0 0.0
  %1923 = vmatpush1.msra.mxu0 0.0
  %1924 = vmatprep.subr.mxu0 0.0
  %1925 = vmatpush1.msra.mxu0 0.0
  %1926 = vmatprep.subr.mxu0 0.0
  %1927 = vmatpush1.msra.mxu0 0.0
  %1928 = vmatprep.subr.mxu0 0.0
  %1929 = vmatpush1.msra.mxu0 0.0
  %1930 = vmatprep.subr.mxu0 0.0
  %1931 = vmatpush1.msra.mxu0 0.0
  %1932 = vmatprep.subr.mxu0 0.0
  %1933 = vmatpush1.msra.mxu0 0.0
  %1934 = vmatprep.subr.mxu0 0.0
  %1935 = vmatpush1.msra.mxu0 0.0
  %1936 = vmatprep.subr.mxu0 0.0
  %1937 = vmatpush1.msra.mxu0 0.0
  %1938 = vmatprep.subr.mxu0 0.0
  %1939 = vmatpush1.msra.mxu0 0.0
  %1940 = vmatprep.subr.mxu0 0.0
  %1941 = vmatpush1.msra.mxu0 0.0
  %1942 = vmatprep.subr.mxu0 0.0
  %1943 = vmatpush1.msra.mxu0 0.0
  %1944 = vmatprep.subr.mxu0 0.0
  %1945 = vmatpush1.msra.mxu0 0.0
  %1946 = vmatprep.subr.mxu0 0.0
  %1947 = vmatpush1.msra.mxu0 0.0
  %1948 = vmatprep.mubr.f32.mxu0 0.0
  %1949 = vmatmul.mubr.f32.gmra.mrb[0].mxu0 %v1882
  %v1950 = vpop.f32.mrb[0].mxu0
  %v1951 = vadd.f32 0.0, %v1950
  %v1952 = vpop.f32.mrb[0].mxu0
  %1953 = vdwg.mxu0
  %v1954 = vadd.f32 %v1165, %v1951
  %v1955 = vxor.u32 %v1954, 2147483648
  %v1956 = vmul.f32 %v1955, 1.442695
  %v1957 = vpow.pop %v1956
  %v1958 = vadd.f32 %v1957, 1.0
  %v1959 = vrcp.pop %v1958
  %v1960 = vmul.f32 1.0, %v1959
  %v1961 = vtanh.pop %v1954
  %v1962 = vmul.f32 %v1960, %v1872
  %1964 = vrot.lane.b32.xlu0 %v1961, 32
  %v1965 = vpop.permute.xlu0 %1964
  %v1967 = vmul.f32 %v1960, %v1965
  %1969 = vrot.lane.b32.xlu0 %v1967, 32
  %v1970 = vpop.permute.xlu0 %1969
  %v1972 = vadd.f32 %v1962, %v1970
  %v1973 = vtanh.pop %v1972
  %1975 = vrot.lane.b32.xlu0 %v1973, 32
  %v1976 = vpop.permute.xlu0 %1975
  %v1978 = vmul.f32 %v1960, %v1976
  %1980 = vrot.lane.b32.xlu0 %v1978, 64
  %v1981 = vpop.permute.xlu0 %1980
  %1983 = vst.msk [vmem:[%s1173] sm:$0xff] %vm191, %v1981
  %1985 = vrot.lane.b32.xlu0 %v1972, 96
  %v1986 = vpop.permute.xlu0 %1985
  %1988 = vst.msk [vmem:[%s1175] sm:$0xff] %vm191, %v1986
  // Predicated region
  $region34: #{tpu_custom_call.1} parent=0 // pred_check
    %p1989 = pneg %p26
  $region35: #{tpu_custom_call.1} parent=0 // pred_check_branch
    %1991 = sbr.rel (%p1989) target = $region37
  $region36: #{tpu_custom_call.1} parent=0 // pred_region
    %v1992 = vld [vmem:[%s5] sm:$0xff]
    %v1993 = vld [vmem:[%s5 + $0x8] sm:$0xff]
    %v1994 = vld [vmem:[%s5 + $0x10] sm:$0xff]
    %v1995 = vld [vmem:[%s5 + $0x18] sm:$0xff]
    %v1996 = vld [vmem:[%s6] sm:$0x1]
    %v1998 = vlaneseq
    %v1999 = vshrl.u32 %v1998, 7
    %v2000 = vsub.s32 0, %v1999
    %v2001 = vrot.slane %v1996, %v2000
    %v2003 = vsel %vm191, %v1981, 0
    %2005 = vmatprep.subr.mxu0 0.0
    %2006 = vmatpush1.msra.mxu0 %v1992
    %2007 = vmatprep.subr.mxu0 0.0
    %2008 = vmatpush1.msra.mxu0 %v1993
    %2009 = vmatprep.subr.mxu0 0.0
    %2010 = vmatpush1.msra.mxu0 %v1994
    %2011 = vmatprep.subr.mxu0 0.0
    %2012 = vmatpush1.msra.mxu0 %v1995
    %2013 = vmatprep.subr.mxu0 0.0
    %2014 = vmatpush1.msra.mxu0 0.0
    %2015 = vmatprep.subr.mxu0 0.0
    %2016 = vmatpush1.msra.mxu0 0.0
    %2017 = vmatprep.subr.mxu0 0.0
    %2018 = vmatpush1.msra.mxu0 0.0
    %2019 = vmatprep.subr.mxu0 0.0
    %2020 = vmatpush1.msra.mxu0 0.0
    %2021 = vmatprep.subr.mxu0 0.0
    %2022 = vmatpush1.msra.mxu0 0.0
    %2023 = vmatprep.subr.mxu0 0.0
    %2024 = vmatpush1.msra.mxu0 0.0
    %2025 = vmatprep.subr.mxu0 0.0
    %2026 = vmatpush1.msra.mxu0 0.0
    %2027 = vmatprep.subr.mxu0 0.0
    %2028 = vmatpush1.msra.mxu0 0.0
    %2029 = vmatprep.subr.mxu0 0.0
    %2030 = vmatpush1.msra.mxu0 0.0
    %2031 = vmatprep.subr.mxu0 0.0
    %2032 = vmatpush1.msra.mxu0 0.0
    %2033 = vmatprep.subr.mxu0 0.0
    %2034 = vmatpush1.msra.mxu0 0.0
    %2035 = vmatprep.subr.mxu0 0.0
    %2036 = vmatpush1.msra.mxu0 0.0
    %2037 = vmatprep.subr.mxu0 0.0
    %2038 = vmatpush1.msra.mxu0 0.0
    %2039 = vmatprep.subr.mxu0 0.0
    %2040 = vmatpush1.msra.mxu0 0.0
    %2041 = vmatprep.subr.mxu0 0.0
    %2042 = vmatpush1.msra.mxu0 0.0
    %2043 = vmatprep.subr.mxu0 0.0
    %2044 = vmatpush1.msra.mxu0 0.0
    %2045 = vmatprep.subr.mxu0 0.0
    %2046 = vmatpush1.msra.mxu0 0.0
    %2047 = vmatprep.subr.mxu0 0.0
    %2048 = vmatpush1.msra.mxu0 0.0
    %2049 = vmatprep.subr.mxu0 0.0
    %2050 = vmatpush1.msra.mxu0 0.0
    %2051 = vmatprep.subr.mxu0 0.0
    %2052 = vmatpush1.msra.mxu0 0.0
    %2053 = vmatprep.subr.mxu0 0.0
    %2054 = vmatpush1.msra.mxu0 0.0
    %2055 = vmatprep.subr.mxu0 0.0
    %2056 = vmatpush1.msra.mxu0 0.0
    %2057 = vmatprep.subr.mxu0 0.0
    %2058 = vmatpush1.msra.mxu0 0.0
    %2059 = vmatprep.subr.mxu0 0.0
    %2060 = vmatpush1.msra.mxu0 0.0
    %2061 = vmatprep.subr.mxu0 0.0
    %2062 = vmatpush1.msra.mxu0 0.0
    %2063 = vmatprep.subr.mxu0 0.0
    %2064 = vmatpush1.msra.mxu0 0.0
    %2065 = vmatprep.subr.mxu0 0.0
    %2066 = vmatpush1.msra.mxu0 0.0
    %2067 = vmatprep.subr.mxu0 0.0
    %2068 = vmatpush1.msra.mxu0 0.0
    %2069 = vmatprep.mubr.f32.mxu0 0.0
    %2070 = vmatmul.mubr.f32.gmra.mrb[0].mxu0 %v2003
    %v2071 = vpop.f32.mrb[0].mxu0
    %v2072 = vadd.f32 %v2001, %v2071
    %v2073 = vpop.f32.mrb[0].mxu0
    %2074 = vdwg.mxu0
    %vm2075 = vcmask 23552
    %2076 = vst.msk [vmem:[%s7] sm:$0xff] %vm2075, %v2072
  $region37: #{tpu_custom_call.1} parent=0 // pred_fallthru
    _
  // Predicated region
  $region38: #{tpu_custom_call.1} parent=0 // pred_check
    _
  $region39: #{tpu_custom_call.1} parent=0 // pred_check_branch
    %2078 = sbr.rel (0) target = $region41
  $region40: #{tpu_custom_call.1} parent=0 // pred_region
    _
  $region41: #{tpu_custom_call.1} parent=0 // pred_fallthru
    _
  // Predicated region
  $region42: #{tpu_custom_call.1} parent=0 // pred_check
    _
  $region43: #{tpu_custom_call.1} parent=0 // pred_check_branch
    %2080 = sbr.rel (0) target = $region45
  $region44: #{tpu_custom_call.1} parent=0 // pred_region
    _
  $region45: #{tpu_custom_call.1} parent=0 // pred_fallthru
    _

</llo_original>
